<compile_context>
chip_gen: v5e
topology: v5e:2x2
jax: 0.10.0
libtpu: 0.0.40
codegen_flags: <defaults>
</compile_context>

<pallas_src>
import functools

import jax
import jax.numpy as jnp
from jax import lax
from jax.experimental import pallas as pl
from jax.experimental.pallas import tpu as pltpu


def message_net_kernel(start_ref, end_ref, x_ref,
                       we1a_ref, we1b_ref, be1_ref, we2_ref, be2_ref,
                       wn1a_ref, wn1b_ref, bn1_ref, wn2_ref, bn2_ref,
                       out_ref, msg_acc_ref):
    k = pl.program_id(0)

    @pl.when(k == 0)
    def _init():
        msg_acc_ref[...] = jnp.zeros_like(msg_acc_ref)

    x = x_ref[...]                                       # [N, H] f32 (resident)
    start_ids = start_ref[...]                           # [TE, 1] int32
    end_ids = end_ref[...]                               # [TE, 1] int32
    te = start_ids.shape[0]
    n = x.shape[0]

    # --- gather x[start], x[end] via f32 one-hot matmuls (exact; x never rounded) ---
    node_iota = lax.broadcasted_iota(jnp.int32, (te, n), 1)          # [TE, N]
    g_start = (start_ids == node_iota).astype(jnp.float32)           # [TE, N]
    g_end = (end_ids == node_iota).astype(jnp.float32)               # [TE, N]
    x_start = jnp.dot(g_start, x, preferred_element_type=jnp.float32)    # [TE, H]
    x_end = jnp.dot(g_end, x, preferred_element_type=jnp.float32)        # [TE, H]

    # --- edge network: split-weight Linear (bf16 weights) -> ReLU -> lane reduce -> sigmoid ---
    h_e = (jnp.dot(x_start.astype(jnp.bfloat16), we1a_ref[...],
                   preferred_element_type=jnp.float32)
           + jnp.dot(x_end.astype(jnp.bfloat16), we1b_ref[...],
                     preferred_element_type=jnp.float32)
           + be1_ref[...])                                            # [TE, Dh_pad] f32
    h_e = jnp.maximum(h_e, 0.0)
    # Dh_pad -> 1 projection on VPU/XLU (width-1 MXU matmul would waste 127/128 lanes)
    e_logit = jnp.sum(h_e * we2_ref[...], axis=-1, keepdims=True) + be2_ref[...]
    e = jax.nn.sigmoid(e_logit)                                       # [TE, 1] f32

    # --- scatter_add(e * x[start], end): contract edge dim 0 directly, all f32 ---
    weighted = e * x_start                                            # [TE, H] f32
    msg_acc_ref[...] += lax.dot_general(
        g_end, weighted,
        dimension_numbers=(((0,), (0,)), ((), ())),
        preferred_element_type=jnp.float32)                           # [N, H]

    # --- finalize on the last edge tile: node MLP (split weights) + residual ---
    @pl.when(k == pl.num_programs(0) - 1)
    def _finalize():
        msgs = msg_acc_ref[...]                                       # [N, H] f32
        h_n = (jnp.dot(msgs.astype(jnp.bfloat16), wn1a_ref[...],
                       preferred_element_type=jnp.float32)
               + jnp.dot(x.astype(jnp.bfloat16), wn1b_ref[...],
                         preferred_element_type=jnp.float32)
               + bn1_ref[...])                                        # [N, Dh_pad]
        h_n = jnp.maximum(h_n, 0.0)
        x_out = jnp.dot(h_n.astype(jnp.bfloat16), wn2_ref[...],
                        preferred_element_type=jnp.float32) + bn2_ref[...]
        out_ref[...] = x_out + x


def _derive_tile_and_vmem(N, H, Dh_pad, E, requested_te):
    """Per-generation scoped-VMEM limit and edge-tile size (trace-time Python)."""
    try:
        cap = int(getattr(pltpu.get_tpu_info(), "vmem_capacity_bytes", 0)) or (64 << 20)
    except Exception:
        cap = 64 << 20                       # assume smallest (v7x per-TC VMEM)
    # ~48 MiB on v7x (64 MiB physical), ~96 MiB on v5e/v6e (128 MiB physical)
    vmem_limit = min((cap * 3) // 4, 112 << 20)

    # resident blocks (double-buffered by the pipeline) + accumulator + weights
    resident = 2 * (2 * N * H * 4)                                    # x + out
    resident += N * H * 4                                             # msg accumulator
    resident += 2 * (4 * H * Dh_pad * 2 + Dh_pad * H * 2 + 4 * Dh_pad * 4 + (H + 2) * 4)
    # per-edge-row working set: two f32 one-hots, gathers, edge-MLP intermediates, indices
    per_row = (2 * N + 4 * H + 2 * Dh_pad + 4) * 4
    budget = vmem_limit // 2 - resident                               # leave headroom
    te_cap = max(8, (budget // max(per_row, 1)) // 8 * 8)

    te = min(int(requested_te), te_cap, max(8, -(-E // 8) * 8))
    te = max(8, (te // 8) * 8)
    return te, int(vmem_limit)


@functools.partial(jax.jit, static_argnames=("edge_tile",))
def message_net(x, start, end, params, *, edge_tile=256):
    """x: [N, H] f32, start/end: [E] int32. Returns [N, H] f32 (aggregation='sum')."""
    N, H = x.shape
    E = start.shape[0]
    Dh = params["we1"].shape[1]
    Dh_pad = -(-Dh // 128) * 128                     # pad hidden dim to full lanes

    te, vmem_limit = _derive_tile_and_vmem(N, H, Dh_pad, E, edge_tile)
    n_tiles = -(-E // te)
    e_pad = n_tiles * te
    pad = e_pad - E

    start_i = start.astype(jnp.int32)
    end_i = end.astype(jnp.int32)
    if pad:
        # pad with out-of-range index N -> all-zero one-hot rows -> no contribution
        start_i = jnp.concatenate([start_i, jnp.full((pad,), N, jnp.int32)])
        end_i = jnp.concatenate([end_i, jnp.full((pad,), N, jnp.int32)])
    start2 = start_i.reshape(e_pad, 1)
    end2 = end_i.reshape(e_pad, 1)

    def pad_cols(a):
        return jnp.pad(a, ((0, 0), (0, Dh_pad - a.shape[1])))

    def pad_rows(a):
        return jnp.pad(a, ((0, Dh_pad - a.shape[0]), (0, 0)))

    # split first-layer weights (avoids lane-axis concat inside the kernel),
    # zero-pad the Dh axis to Dh_pad (exact: padded lanes stay 0 through ReLU).
    we1a = pad_cols(params["we1"][:H]).astype(jnp.bfloat16)      # multiplies x[start]
    we1b = pad_cols(params["we1"][H:]).astype(jnp.bfloat16)      # multiplies x[end]
    wn1a = pad_cols(params["wn1"][:H]).astype(jnp.bfloat16)      # multiplies messages
    wn1b = pad_cols(params["wn1"][H:]).astype(jnp.bfloat16)      # multiplies x
    be1 = pad_cols(params["be1"].reshape(1, Dh)).astype(jnp.float32)
    bn1 = pad_cols(params["bn1"].reshape(1, Dh)).astype(jnp.float32)
    we2_row = pad_cols(params["we2"].reshape(1, Dh)).astype(jnp.float32)  # [Dh,1] -> [1,Dh_pad]
    be2 = params["be2"].reshape(1, 1).astype(jnp.float32)
    wn2 = pad_rows(params["wn2"]).astype(jnp.bfloat16)           # [Dh_pad, H]
    bn2 = params["bn2"].reshape(1, H).astype(jnp.float32)

    full = lambda k: (0, 0)
    grid_spec = pltpu.PrefetchScalarGridSpec(
        num_scalar_prefetch=0,
        grid=(n_tiles,),
        in_specs=[
            pl.BlockSpec((te, 1), lambda k: (k, 0)),     # start (edge-tiled)
            pl.BlockSpec((te, 1), lambda k: (k, 0)),     # end   (edge-tiled)
            pl.BlockSpec((N, H), full),                  # x (resident)
            pl.BlockSpec((H, Dh_pad), full),             # we1a
            pl.BlockSpec((H, Dh_pad), full),             # we1b
            pl.BlockSpec((1, Dh_pad), full),             # be1
            pl.BlockSpec((1, Dh_pad), full),             # we2 (transposed row)
            pl.BlockSpec((1, 1), full),                  # be2
            pl.BlockSpec((H, Dh_pad), full),             # wn1a
            pl.BlockSpec((H, Dh_pad), full),             # wn1b
            pl.BlockSpec((1, Dh_pad), full),             # bn1
            pl.BlockSpec((Dh_pad, H), full),             # wn2
            pl.BlockSpec((1, H), full),                  # bn2
        ],
        out_specs=pl.BlockSpec((N, H), full),
        scratch_shapes=[pltpu.VMEM((N, H), jnp.float32)],   # message accumulator
    )

    return pl.pallas_call(
        message_net_kernel,
        out_shape=jax.ShapeDtypeStruct((N, H), jnp.float32),
        grid_spec=grid_spec,
        compiler_params=pltpu.CompilerParams(
            dimension_semantics=("arbitrary",),          # edge axis = reduction
            vmem_limit_bytes=vmem_limit),
    )(start2, end2, x,
      we1a, we1b, be1, we2_row, be2,
      wn1a, wn1b, bn1, wn2, bn2)


def reference(x, start, end, params):
    """Pure f32 JAX reference matching the PyTorch module (aggregation='sum')."""
    x_start = x[start]
    x_end = x[end]
    edge_inputs = jnp.concatenate([x_start, x_end], axis=1)
    h_e = jax.nn.relu(edge_inputs @ params["we1"] + params["be1"])
    e = jax.nn.sigmoid(h_e @ params["we2"] + params["be2"])
    messages = jax.ops.segment_sum(e * x_start, end, num_segments=x.shape[0])
    node_inputs = jnp.concatenate([messages, x], axis=1)
    h_n = jax.nn.relu(node_inputs @ params["wn1"] + params["bn1"])
    return h_n @ params["wn2"] + params["bn2"] + x


if __name__ == "__main__":
    # nodes, feature dim, MLP hidden, edges (E > edge_tile so multiple grid steps
    # + edge padding are exercised)
    N, H, Dh, E = 32, 16, 64, 384

    key = jax.random.PRNGKey(0)
    keys = jax.random.split(key, 11)

    x = jax.random.normal(keys[0], (N, H), dtype=jnp.float32)
    start = jax.random.randint(keys[1], (E,), 0, N, dtype=jnp.int32)
    end = jax.random.randint(keys[2], (E,), 0, N, dtype=jnp.int32)

    def lin(k, fan_in, fan_out):
        scale = 1.0 / jnp.sqrt(fan_in)
        return jax.random.uniform(k, (fan_in, fan_out), jnp.float32, -scale, scale)

    params = {
        "we1": lin(keys[3], 2 * H, Dh),
        "be1": jax.random.uniform(keys[4], (1, Dh), jnp.float32, -0.1, 0.1),
        "we2": lin(keys[5], Dh, 1),
        "be2": jax.random.uniform(keys[6], (1, 1), jnp.float32, -0.1, 0.1),
        "wn1": lin(keys[7], 2 * H, Dh),
        "bn1": jax.random.uniform(keys[8], (1, Dh), jnp.float32, -0.1, 0.1),
        "wn2": lin(keys[9], Dh, H),
        "bn2": jax.random.uniform(keys[10], (1, H), jnp.float32, -0.1, 0.1),
    }

    out = message_net(x, start, end, params)   # default edge_tile=256 -> 2 tiles here
    out = jax.block_until_ready(out)

    ref = reference(x, start, end, params)
    assert out.shape == (N, H)
    # Message path (gather / scatter / accumulate / residual) is exact f32; only the
    # MLP weight matmuls are bf16, so a bf16-appropriate tolerance suffices.
    assert jnp.allclose(out, ref, atol=1e-1, rtol=5e-2), "mismatch vs JAX reference"

    print("KERNEL_OK")
</pallas_src>

<mosaic_0001>
module attributes {stable_mosaic.version = 11 : i64} {
  func.func @message_net_kernel(%arg0: i32, %arg1: memref<256x1xi32, #tpu.memory_space<vmem>>, %arg2: memref<256x1xi32, #tpu.memory_space<vmem>>, %arg3: memref<32x16xf32, #tpu.memory_space<vmem>>, %arg4: memref<16x128xbf16, #tpu.memory_space<vmem>>, %arg5: memref<16x128xbf16, #tpu.memory_space<vmem>>, %arg6: memref<1x128xf32, #tpu.memory_space<vmem>>, %arg7: memref<1x128xf32, #tpu.memory_space<vmem>>, %arg8: memref<1x1xf32, #tpu.memory_space<vmem>>, %arg9: memref<16x128xbf16, #tpu.memory_space<vmem>>, %arg10: memref<16x128xbf16, #tpu.memory_space<vmem>>, %arg11: memref<1x128xf32, #tpu.memory_space<vmem>>, %arg12: memref<128x16xbf16, #tpu.memory_space<vmem>>, %arg13: memref<1x16xf32, #tpu.memory_space<vmem>>, %arg14: memref<32x16xf32, #tpu.memory_space<vmem>>, %arg15: memref<32x16xf32, #tpu.memory_space<vmem>>) attributes {dimension_semantics = [#tpu.dimension_semantics<arbitrary>], iteration_bounds = array<i64: 2>, scalar_prefetch = 0 : i64, scratch_operands = 1 : i64, tpu.core_type = #tpu.core_type<tc>, window_params = [{transform_indices = @transform_0, window_bounds = array<i64: 256, 1>}, {transform_indices = @transform_1, window_bounds = array<i64: 256, 1>}, {pipeline_mode = #tpu.pipeline_mode<synchronous>, transform_indices = @transform_2, window_bounds = array<i64: 32, 16>}, {pipeline_mode = #tpu.pipeline_mode<synchronous>, transform_indices = @transform_3, window_bounds = array<i64: 16, 128>}, {pipeline_mode = #tpu.pipeline_mode<synchronous>, transform_indices = @transform_4, window_bounds = array<i64: 16, 128>}, {pipeline_mode = #tpu.pipeline_mode<synchronous>, transform_indices = @transform_5, window_bounds = array<i64: 1, 128>}, {pipeline_mode = #tpu.pipeline_mode<synchronous>, transform_indices = @transform_6, window_bounds = array<i64: 1, 128>}, {pipeline_mode = #tpu.pipeline_mode<synchronous>, transform_indices = @transform_7, window_bounds = array<i64: 1, 1>}, {pipeline_mode = #tpu.pipeline_mode<synchronous>, transform_indices = @transform_8, window_bounds = array<i64: 16, 128>}, {pipeline_mode = #tpu.pipeline_mode<synchronous>, transform_indices = @transform_9, window_bounds = array<i64: 16, 128>}, {pipeline_mode = #tpu.pipeline_mode<synchronous>, transform_indices = @transform_10, window_bounds = array<i64: 1, 128>}, {pipeline_mode = #tpu.pipeline_mode<synchronous>, transform_indices = @transform_11, window_bounds = array<i64: 128, 16>}, {pipeline_mode = #tpu.pipeline_mode<synchronous>, transform_indices = @transform_12, window_bounds = array<i64: 1, 16>}, {pipeline_mode = #tpu.pipeline_mode<synchronous>, transform_indices = @transform_13, window_bounds = array<i64: 32, 16>}]} {
    %c0_i32 = arith.constant 0 : i32
    %0 = arith.cmpi eq, %arg0, %c0_i32 : i32
    %1 = arith.extui %0 : i1 to i32
    %c0_i32_0 = arith.constant 0 : i32
    %2 = arith.cmpi ne, %1, %c0_i32_0 : i32
    scf.if %2 {
      %cst_28 = arith.constant 0.000000e+00 : f32
      %51 = vector.broadcast %cst_28 : f32 to vector<32x16xf32>
      %c0_29 = arith.constant 0 : index
      %c0_30 = arith.constant 0 : index
      %52 = vector.load %arg15[%c0_29, %c0_30] : memref<32x16xf32, #tpu.memory_space<vmem>>, vector<32x16xf32>
      tpu.vector_store %arg15[%c0_29, %c0_30], %51 {strides = array<i32>} : memref<32x16xf32, #tpu.memory_space<vmem>>, vector<32x16xf32>,
    } else {
    }
    %c0 = arith.constant 0 : index
    %c0_1 = arith.constant 0 : index
    %3 = vector.load %arg3[%c0, %c0_1] : memref<32x16xf32, #tpu.memory_space<vmem>>, vector<32x16xf32>
    %c0_2 = arith.constant 0 : index
    %c0_3 = arith.constant 0 : index
    %4 = vector.load %arg1[%c0_2, %c0_3] : memref<256x1xi32, #tpu.memory_space<vmem>>, vector<256x1xi32>
    %c0_4 = arith.constant 0 : index
    %c0_5 = arith.constant 0 : index
    %5 = vector.load %arg2[%c0_4, %c0_5] : memref<256x1xi32, #tpu.memory_space<vmem>>, vector<256x1xi32>
    %6 = tpu.iota {dimensions = array<i32: 1>} : vector<256x32xi32>
    %7 = vector.broadcast %4 : vector<256x1xi32> to vector<256x32xi32>
    %8 = arith.cmpi eq, %7, %6 : vector<256x32xi32>
    %9 = arith.extui %8 : vector<256x32xi1> to vector<256x32xi32>
    %10 = arith.sitofp %9 : vector<256x32xi32> to vector<256x32xf32>
    %11 = vector.broadcast %5 : vector<256x1xi32> to vector<256x32xi32>
    %12 = arith.cmpi eq, %11, %6 : vector<256x32xi32>
    %13 = arith.extui %12 : vector<256x32xi1> to vector<256x32xi32>
    %14 = arith.sitofp %13 : vector<256x32xi32> to vector<256x32xf32>
    %cst = arith.constant dense<0.000000e+00> : vector<256x16xf32>
    %15 = tpu.matmul %10, %3, %cst {dimension_numbers = #tpu.dot_dimension_numbers<[1], [0], [0], [1], [0, 0, 1, 1], [], []>} : vector<256x32xf32>, vector<32x16xf32>, vector<256x16xf32> -> vector<256x16xf32>
    %cst_6 = arith.constant dense<0.000000e+00> : vector<256x16xf32>
    %16 = tpu.matmul %14, %3, %cst_6 {dimension_numbers = #tpu.dot_dimension_numbers<[1], [0], [0], [1], [0, 0, 1, 1], [], []>} : vector<256x32xf32>, vector<32x16xf32>, vector<256x16xf32> -> vector<256x16xf32>
    %17 = arith.truncf %15 : vector<256x16xf32> to vector<256x16xbf16>
    %c0_7 = arith.constant 0 : index
    %c0_8 = arith.constant 0 : index
    %18 = vector.load %arg4[%c0_7, %c0_8] : memref<16x128xbf16, #tpu.memory_space<vmem>>, vector<16x128xbf16>
    %cst_9 = arith.constant dense<0.000000e+00> : vector<256x128xf32>
    %19 = tpu.matmul %17, %18, %cst_9 {dimension_numbers = #tpu.dot_dimension_numbers<[1], [0], [0], [1], [0, 0, 1, 1], [], []>} : vector<256x16xbf16>, vector<16x128xbf16>, vector<256x128xf32> -> vector<256x128xf32>
    %20 = arith.truncf %16 : vector<256x16xf32> to vector<256x16xbf16>
    %c0_10 = arith.constant 0 : index
    %c0_11 = arith.constant 0 : index
    %21 = vector.load %arg5[%c0_10, %c0_11] : memref<16x128xbf16, #tpu.memory_space<vmem>>, vector<16x128xbf16>
    %cst_12 = arith.constant dense<0.000000e+00> : vector<256x128xf32>
    %22 = tpu.matmul %20, %21, %cst_12 {dimension_numbers = #tpu.dot_dimension_numbers<[1], [0], [0], [1], [0, 0, 1, 1], [], []>} : vector<256x16xbf16>, vector<16x128xbf16>, vector<256x128xf32> -> vector<256x128xf32>
    %23 = arith.addf %19, %22 : vector<256x128xf32>
    %c0_13 = arith.constant 0 : index
    %c0_14 = arith.constant 0 : index
    %24 = vector.load %arg6[%c0_13, %c0_14] : memref<1x128xf32, #tpu.memory_space<vmem>>, vector<1x128xf32>
    %25 = vector.broadcast %24 : vector<1x128xf32> to vector<256x128xf32>
    %26 = arith.addf %23, %25 : vector<256x128xf32>
    %cst_15 = arith.constant 0.000000e+00 : f32
    %27 = vector.broadcast %cst_15 : f32 to vector<256x128xf32>
    %28 = arith.maximumf %26, %27 : vector<256x128xf32>
    %c0_16 = arith.constant 0 : index
    %c0_17 = arith.constant 0 : index
    %29 = vector.load %arg7[%c0_16, %c0_17] : memref<1x128xf32, #tpu.memory_space<vmem>>, vector<1x128xf32>
    %30 = vector.broadcast %29 : vector<1x128xf32> to vector<256x128xf32>
    %31 = arith.mulf %28, %30 : vector<256x128xf32>
    %cst_18 = arith.constant dense<0.000000e+00> : vector<256xf32>
    %32 = vector.multi_reduction <add>, %31, %cst_18 [1] : vector<256x128xf32> to vector<256xf32>
    %33 = vector.shape_cast %32 : vector<256xf32> to vector<256x1xf32>
    %c0_19 = arith.constant 0 : index
    %c0_20 = arith.constant 0 : index
    %34 = vector.load %arg8[%c0_19, %c0_20] : memref<1x1xf32, #tpu.memory_space<vmem>>, vector<1x1xf32>
    %35 = vector.broadcast %34 : vector<1x1xf32> to vector<256x1xf32>
    %36 = arith.addf %33, %35 : vector<256x1xf32>
    %37 = arith.negf %36 : vector<256x1xf32>
    %38 = math.exp %37 : vector<256x1xf32>
    %cst_21 = arith.constant 1.000000e+00 : f32
    %39 = vector.broadcast %cst_21 : f32 to vector<256x1xf32>
    %40 = arith.addf %39, %38 : vector<256x1xf32>
    %41 = arith.divf %39, %40 : vector<256x1xf32>
    %42 = vector.broadcast %41 : vector<256x1xf32> to vector<256x16xf32>
    %43 = arith.mulf %42, %15 : vector<256x16xf32>
    %c0_22 = arith.constant 0 : index
    %c0_23 = arith.constant 0 : index
    %44 = vector.load %arg15[%c0_22, %c0_23] : memref<32x16xf32, #tpu.memory_space<vmem>>, vector<32x16xf32>
    %cst_24 = arith.constant dense<0.000000e+00> : vector<32x16xf32>
    %45 = tpu.matmul %14, %43, %cst_24 {dimension_numbers = #tpu.dot_dimension_numbers<[0], [0], [1], [1], [0, 1, 1, 1], [], []>} : vector<256x32xf32>, vector<256x16xf32>, vector<32x16xf32> -> vector<32x16xf32>
    %46 = arith.addf %44, %45 : vector<32x16xf32>
    %c0_25 = arith.constant 0 : index
    %c0_26 = arith.constant 0 : index
    %47 = vector.load %arg15[%c0_25, %c0_26] : memref<32x16xf32, #tpu.memory_space<vmem>>, vector<32x16xf32>
    tpu.vector_store %arg15[%c0_25, %c0_26], %46 {strides = array<i32>} : memref<32x16xf32, #tpu.memory_space<vmem>>, vector<32x16xf32>,
    %c1_i32 = arith.constant 1 : i32
    %48 = arith.cmpi eq, %arg0, %c1_i32 : i32
    %49 = arith.extui %48 : i1 to i32
    %c0_i32_27 = arith.constant 0 : i32
    %50 = arith.cmpi ne, %49, %c0_i32_27 : i32
    scf.if %50 {
      %c0_28 = arith.constant 0 : index
      %c0_29 = arith.constant 0 : index
      %51 = vector.load %arg15[%c0_28, %c0_29] : memref<32x16xf32, #tpu.memory_space<vmem>>, vector<32x16xf32>
      %52 = arith.truncf %51 : vector<32x16xf32> to vector<32x16xbf16>
      %c0_30 = arith.constant 0 : index
      %c0_31 = arith.constant 0 : index
      %53 = vector.load %arg9[%c0_30, %c0_31] : memref<16x128xbf16, #tpu.memory_space<vmem>>, vector<16x128xbf16>
      %cst_32 = arith.constant dense<0.000000e+00> : vector<32x128xf32>
      %54 = tpu.matmul %52, %53, %cst_32 {dimension_numbers = #tpu.dot_dimension_numbers<[1], [0], [0], [1], [0, 0, 1, 1], [], []>} : vector<32x16xbf16>, vector<16x128xbf16>, vector<32x128xf32> -> vector<32x128xf32>
      %55 = arith.truncf %3 : vector<32x16xf32> to vector<32x16xbf16>
      %c0_33 = arith.constant 0 : index
      %c0_34 = arith.constant 0 : index
      %56 = vector.load %arg10[%c0_33, %c0_34] : memref<16x128xbf16, #tpu.memory_space<vmem>>, vector<16x128xbf16>
      %cst_35 = arith.constant dense<0.000000e+00> : vector<32x128xf32>
      %57 = tpu.matmul %55, %56, %cst_35 {dimension_numbers = #tpu.dot_dimension_numbers<[1], [0], [0], [1], [0, 0, 1, 1], [], []>} : vector<32x16xbf16>, vector<16x128xbf16>, vector<32x128xf32> -> vector<32x128xf32>
      %58 = arith.addf %54, %57 : vector<32x128xf32>
      %c0_36 = arith.constant 0 : index
      %c0_37 = arith.constant 0 : index
      %59 = vector.load %arg11[%c0_36, %c0_37] : memref<1x128xf32, #tpu.memory_space<vmem>>, vector<1x128xf32>
      %60 = vector.broadcast %59 : vector<1x128xf32> to vector<32x128xf32>
      %61 = arith.addf %58, %60 : vector<32x128xf32>
      %cst_38 = arith.constant 0.000000e+00 : f32
      %62 = vector.broadcast %cst_38 : f32 to vector<32x128xf32>
      %63 = arith.maximumf %61, %62 : vector<32x128xf32>
      %64 = arith.truncf %63 : vector<32x128xf32> to vector<32x128xbf16>
      %c0_39 = arith.constant 0 : index
      %c0_40 = arith.constant 0 : index
      %65 = vector.load %arg12[%c0_39, %c0_40] : memref<128x16xbf16, #tpu.memory_space<vmem>>, vector<128x16xbf16>
      %cst_41 = arith.constant dense<0.000000e+00> : vector<32x16xf32>
      %66 = tpu.matmul %64, %65, %cst_41 {dimension_numbers = #tpu.dot_dimension_numbers<[1], [0], [0], [1], [0, 0, 1, 1], [], []>} : vector<32x128xbf16>, vector<128x16xbf16>, vector<32x16xf32> -> vector<32x16xf32>
      %c0_42 = arith.constant 0 : index
      %c0_43 = arith.constant 0 : index
      %67 = vector.load %arg13[%c0_42, %c0_43] : memref<1x16xf32, #tpu.memory_space<vmem>>, vector<1x16xf32>
      %68 = vector.broadcast %67 : vector<1x16xf32> to vector<32x16xf32>
      %69 = arith.addf %66, %68 : vector<32x16xf32>
      %70 = arith.addf %69, %3 : vector<32x16xf32>
      %c0_44 = arith.constant 0 : index
      %c0_45 = arith.constant 0 : index
      %71 = vector.load %arg14[%c0_44, %c0_45] : memref<32x16xf32, #tpu.memory_space<vmem>>, vector<32x16xf32>
      tpu.vector_store %arg14[%c0_44, %c0_45], %70 {strides = array<i32>} : memref<32x16xf32, #tpu.memory_space<vmem>>, vector<32x16xf32>,
    } else {
    }
    return
  }
  func.func @transform_0(%arg0: i32) -> (i32, i32) {
    %c0_i32 = arith.constant 0 : i32
    %c0_i32_0 = arith.constant 0 : i32
    return %arg0, %c0_i32 : i32, i32
  }
  func.func @transform_1(%arg0: i32) -> (i32, i32) {
    %c0_i32 = arith.constant 0 : i32
    %c0_i32_0 = arith.constant 0 : i32
    return %arg0, %c0_i32 : i32, i32
  }
  func.func @transform_2(%arg0: i32) -> (i32, i32) {
    %c0_i32 = arith.constant 0 : i32
    %c0_i32_0 = arith.constant 0 : i32
    %c0_i32_1 = arith.constant 0 : i32
    return %c0_i32, %c0_i32_0 : i32, i32
  }
  func.func @transform_3(%arg0: i32) -> (i32, i32) {
    %c0_i32 = arith.constant 0 : i32
    %c0_i32_0 = arith.constant 0 : i32
    %c0_i32_1 = arith.constant 0 : i32
    return %c0_i32, %c0_i32_0 : i32, i32
  }
  func.func @transform_4(%arg0: i32) -> (i32, i32) {
    %c0_i32 = arith.constant 0 : i32
    %c0_i32_0 = arith.constant 0 : i32
    %c0_i32_1 = arith.constant 0 : i32
    return %c0_i32, %c0_i32_0 : i32, i32
  }
  func.func @transform_5(%arg0: i32) -> (i32, i32) {
    %c0_i32 = arith.constant 0 : i32
    %c0_i32_0 = arith.constant 0 : i32
    %c0_i32_1 = arith.constant 0 : i32
    return %c0_i32, %c0_i32_0 : i32, i32
  }
  func.func @transform_6(%arg0: i32) -> (i32, i32) {
    %c0_i32 = arith.constant 0 : i32
    %c0_i32_0 = arith.constant 0 : i32
    %c0_i32_1 = arith.constant 0 : i32
    return %c0_i32, %c0_i32_0 : i32, i32
  }
  func.func @transform_7(%arg0: i32) -> (i32, i32) {
    %c0_i32 = arith.constant 0 : i32
    %c0_i32_0 = arith.constant 0 : i32
    %c0_i32_1 = arith.constant 0 : i32
    return %c0_i32, %c0_i32_0 : i32, i32
  }
  func.func @transform_8(%arg0: i32) -> (i32, i32) {
    %c0_i32 = arith.constant 0 : i32
    %c0_i32_0 = arith.constant 0 : i32
    %c0_i32_1 = arith.constant 0 : i32
    return %c0_i32, %c0_i32_0 : i32, i32
  }
  func.func @transform_9(%arg0: i32) -> (i32, i32) {
    %c0_i32 = arith.constant 0 : i32
    %c0_i32_0 = arith.constant 0 : i32
    %c0_i32_1 = arith.constant 0 : i32
    return %c0_i32, %c0_i32_0 : i32, i32
  }
  func.func @transform_10(%arg0: i32) -> (i32, i32) {
    %c0_i32 = arith.constant 0 : i32
    %c0_i32_0 = arith.constant 0 : i32
    %c0_i32_1 = arith.constant 0 : i32
    return %c0_i32, %c0_i32_0 : i32, i32
  }
  func.func @transform_11(%arg0: i32) -> (i32, i32) {
    %c0_i32 = arith.constant 0 : i32
    %c0_i32_0 = arith.constant 0 : i32
    %c0_i32_1 = arith.constant 0 : i32
    return %c0_i32, %c0_i32_0 : i32, i32
  }
  func.func @transform_12(%arg0: i32) -> (i32, i32) {
    %c0_i32 = arith.constant 0 : i32
    %c0_i32_0 = arith.constant 0 : i32
    %c0_i32_1 = arith.constant 0 : i32
    return %c0_i32, %c0_i32_0 : i32, i32
  }
  func.func @transform_13(%arg0: i32) -> (i32, i32) {
    %c0_i32 = arith.constant 0 : i32
    %c0_i32_0 = arith.constant 0 : i32
    %c0_i32_1 = arith.constant 0 : i32
    return %c0_i32, %c0_i32_0 : i32, i32
  }
}

</mosaic_0001>

<llo_original>
// kernel: message_net.1
$region0: #{message_net.1}
  #allocation0 [shape = 'u32[]', space=smem, size = 0x4, offset = 0x4, fixed_abs, tag = 'smem constant byte address 0x4 - core index']
  #allocation1 [shape = 'u32[72,128]{1,0:T(1,128)}', space=vmem, size = 0x9000, scoped, tag = 'internal scratch']
  #allocation2 [shape = 'f32[32,16]{1,0:T(8,128)}', space=vmem, size = 0x4000, scoped, tag = 'scratch operand']
  #allocation3 [shape = 'f32[1,1]{1,0:T(1,128)S(1)}', space=vmem, size = 0x200, scoped, tag = 'scoped memory for message_net.1']
  %s0 = inlined_call_operand.vmem [shape: s32[512,1], index: 0, kind: input, shape index: {}]
  %s1 = inlined_call_operand.vmem [shape: s32[512,1], index: 1, kind: input, shape index: {}]
  %s2 = inlined_call_operand.vmem [shape: f32[32,16], index: 2, kind: input, shape index: {}]
  %s3 = inlined_call_operand.vmem [shape: bf16[16,128], index: 3, kind: input, shape index: {}]
  %s4 = inlined_call_operand.vmem [shape: bf16[16,128], index: 4, kind: input, shape index: {}]
  %s5 = inlined_call_operand.vmem [shape: f32[1,128], index: 5, kind: input, shape index: {}]
  %s6 = inlined_call_operand.vmem [shape: f32[1,128], index: 6, kind: input, shape index: {}]
  %s7 = inlined_call_operand.<no memory space> [shape: f32[1,1], index: 7, kind: input, shape index: {}]
  %s8 = inlined_call_operand.vmem [shape: bf16[16,128], index: 8, kind: input, shape index: {}]
  %s9 = inlined_call_operand.vmem [shape: bf16[16,128], index: 9, kind: input, shape index: {}]
  %s10 = inlined_call_operand.vmem [shape: f32[1,128], index: 10, kind: input, shape index: {}]
  %s11 = inlined_call_operand.vmem [shape: bf16[128,16], index: 11, kind: input, shape index: {}]
  %s12 = inlined_call_operand.vmem [shape: f32[1,16], index: 12, kind: input, shape index: {}]
  %s13 = inlined_call_operand.vmem [shape: f32[32,16], index: 13, kind: output, shape index: {}]
  %s14 = sld [smem:[#allocation0]]
  $region93: #{message_net.1} parent=0
    _
  %s16 = ssub.s32 1, %s14
  %s17 = scalar_select 0, %s16, %s14
  %v18 = vstv %s7
  %19 = vst [vmem:[#allocation3] sm:$0x1] %v18
  loop: start=0, step=1, limit=4
  $region2: #{message_net.1} parent=0 // loop_pre_header
    _
  $region3: #{message_net.1} parent=0 // loop_header
    %s21 = sphi 0, %s25
    %p22 = scmp.ge.s32.totalorder %s21, 4
    %s31 = sphi 0, %s33
    %s34 = sphi 0, %s31
    %s35 = sphi 0, %s34
    %s51 = sphi 0, %s35
    %s57 = sphi 0, %s59
    %s60 = sphi 0, %s57
    %s61 = sphi 0, %s60
    %s77 = sphi 0, %s61
    %s81 = sphi 0, %s81
    %s83 = sphi 0, %s81
    %s84 = sphi 0, %s83
    %s98 = sphi 0, %s84
    %s102 = sphi 0, %s102
    %s104 = sphi 0, %s102
    %s105 = sphi 0, %s104
    %s119 = sphi 0, %s105
    %s123 = sphi 0, %s123
    %s125 = sphi 0, %s123
    %s126 = sphi 0, %s125
    %s140 = sphi 0, %s126
    %s144 = sphi 0, %s144
    %s146 = sphi 0, %s144
    %s147 = sphi 0, %s146
    %s161 = sphi 0, %s147
    %s165 = sphi 0, %s165
    %s167 = sphi 0, %s165
    %s168 = sphi 0, %s167
    %s182 = sphi 0, %s168
    %s186 = sphi 0, %s186
    %s188 = sphi 0, %s186
    %s189 = sphi 0, %s188
    %s203 = sphi 0, %s189
    %s207 = sphi 0, %s207
    %s209 = sphi 0, %s207
    %s210 = sphi 0, %s209
    %s224 = sphi 0, %s210
    %s228 = sphi 0, %s228
    %s230 = sphi 0, %s228
    %s231 = sphi 0, %s230
    %s245 = sphi 0, %s231
    %s249 = sphi 0, %s249
    %s251 = sphi 0, %s249
    %s252 = sphi 0, %s251
    %s266 = sphi 0, %s252
    %s270 = sphi 0, %s270
    %s272 = sphi 0, %s270
    %s273 = sphi 0, %s272
    %s287 = sphi 0, %s273
    %s291 = sphi 0, %s291
    %s293 = sphi 0, %s291
    %s294 = sphi 0, %s293
    %s308 = sphi 0, %s294
    %s312 = sphi 0, %s312
    %s314 = sphi 0, %s312
    %s315 = sphi 0, %s314
    %s329 = sphi 0, %s315
  $region4: #{message_net.1} parent=0 // loop_header_branch
    %24 = sbr.rel (%p22) target = $region8
  $region5: #{message_net.1} parent=0 // loop_body
    %s26 = ssub.s32 %s21, 1
    %s27 = ssub.s32 %s21, 2
    %s28 = sadd.s32 %s21, 1
    %s29 = ssub.s32 %s21, %s28
    %p30 = scmp.eq.s32.totalorder %s29, 0
    %s32 = sadd.s32 %s31, 1
    %s33 = scalar_select %p30, %s31, %s32
    %p36 = pneg %p30
    %p37 = scmp.eq.s32.totalorder %s21, 1
    %p38 = por %p36, %p37
    %p39 = scmp.ne.s32.totalorder %s31, %s34
    %p40 = scmp.eq.s32.totalorder %s21, 0
    %p41 = por %p39, %p40
    %p42 = scmp.ne.s32.totalorder %s31, %s34
    %p43 = scmp.eq.s32.totalorder %s26, 1
    %p44 = por %p42, %p43
    %p45 = scmp.ne.s32.totalorder %s34, %s35
    %p46 = scmp.eq.s32.totalorder %s26, 0
    %p47 = por %p45, %p46
    %p48 = scmp.ne.s32.totalorder %s34, %s35
    %p49 = scmp.eq.s32.totalorder %s27, 1
    %p50 = por %p48, %p49
    %p52 = scmp.ne.s32.totalorder %s35, %s51
    %p53 = scmp.eq.s32.totalorder %s27, 0
    %p54 = por %p52, %p53
    %s55 = ssub.s32 %s21, %s28
    %p56 = scmp.eq.s32.totalorder %s55, 0
    %s58 = sadd.s32 %s57, 1
    %s59 = scalar_select %p56, %s57, %s58
    %p62 = pneg %p56
    %p63 = scmp.eq.s32.totalorder %s21, 1
    %p64 = por %p62, %p63
    %p65 = scmp.ne.s32.totalorder %s57, %s60
    %p66 = scmp.eq.s32.totalorder %s21, 0
    %p67 = por %p65, %p66
    %p68 = scmp.ne.s32.totalorder %s57, %s60
    %p69 = scmp.eq.s32.totalorder %s26, 1
    %p70 = por %p68, %p69
    %p71 = scmp.ne.s32.totalorder %s60, %s61
    %p72 = scmp.eq.s32.totalorder %s26, 0
    %p73 = por %p71, %p72
    %p74 = scmp.ne.s32.totalorder %s60, %s61
    %p75 = scmp.eq.s32.totalorder %s27, 1
    %p76 = por %p74, %p75
    %p78 = scmp.ne.s32.totalorder %s61, %s77
    %p79 = scmp.eq.s32.totalorder %s27, 0
    %p80 = por %p78, %p79
    %s82 = sadd.s32 %s81, 1
    %p85 = scmp.eq.s32.totalorder %s21, 1
    %p86 = scmp.ne.s32.totalorder %s81, %s83
    %p87 = scmp.eq.s32.totalorder %s21, 0
    %p88 = por %p86, %p87
    %p89 = scmp.ne.s32.totalorder %s81, %s83
    %p90 = scmp.eq.s32.totalorder %s26, 1
    %p91 = por %p89, %p90
    %p92 = scmp.ne.s32.totalorder %s83, %s84
    %p93 = scmp.eq.s32.totalorder %s26, 0
    %p94 = por %p92, %p93
    %p95 = scmp.ne.s32.totalorder %s83, %s84
    %p96 = scmp.eq.s32.totalorder %s27, 1
    %p97 = por %p95, %p96
    %p99 = scmp.ne.s32.totalorder %s84, %s98
    %p100 = scmp.eq.s32.totalorder %s27, 0
    %p101 = por %p99, %p100
    %s103 = sadd.s32 %s102, 1
    %p106 = scmp.eq.s32.totalorder %s21, 1
    %p107 = scmp.ne.s32.totalorder %s102, %s104
    %p108 = scmp.eq.s32.totalorder %s21, 0
    %p109 = por %p107, %p108
    %p110 = scmp.ne.s32.totalorder %s102, %s104
    %p111 = scmp.eq.s32.totalorder %s26, 1
    %p112 = por %p110, %p111
    %p113 = scmp.ne.s32.totalorder %s104, %s105
    %p114 = scmp.eq.s32.totalorder %s26, 0
    %p115 = por %p113, %p114
    %p116 = scmp.ne.s32.totalorder %s104, %s105
    %p117 = scmp.eq.s32.totalorder %s27, 1
    %p118 = por %p116, %p117
    %p120 = scmp.ne.s32.totalorder %s105, %s119
    %p121 = scmp.eq.s32.totalorder %s27, 0
    %p122 = por %p120, %p121
    %s124 = sadd.s32 %s123, 1
    %p127 = scmp.eq.s32.totalorder %s21, 1
    %p128 = scmp.ne.s32.totalorder %s123, %s125
    %p129 = scmp.eq.s32.totalorder %s21, 0
    %p130 = por %p128, %p129
    %p131 = scmp.ne.s32.totalorder %s123, %s125
    %p132 = scmp.eq.s32.totalorder %s26, 1
    %p133 = por %p131, %p132
    %p134 = scmp.ne.s32.totalorder %s125, %s126
    %p135 = scmp.eq.s32.totalorder %s26, 0
    %p136 = por %p134, %p135
    %p137 = scmp.ne.s32.totalorder %s125, %s126
    %p138 = scmp.eq.s32.totalorder %s27, 1
    %p139 = por %p137, %p138
    %p141 = scmp.ne.s32.totalorder %s126, %s140
    %p142 = scmp.eq.s32.totalorder %s27, 0
    %p143 = por %p141, %p142
    %s145 = sadd.s32 %s144, 1
    %p148 = scmp.eq.s32.totalorder %s21, 1
    %p149 = scmp.ne.s32.totalorder %s144, %s146
    %p150 = scmp.eq.s32.totalorder %s21, 0
    %p151 = por %p149, %p150
    %p152 = scmp.ne.s32.totalorder %s144, %s146
    %p153 = scmp.eq.s32.totalorder %s26, 1
    %p154 = por %p152, %p153
    %p155 = scmp.ne.s32.totalorder %s146, %s147
    %p156 = scmp.eq.s32.totalorder %s26, 0
    %p157 = por %p155, %p156
    %p158 = scmp.ne.s32.totalorder %s146, %s147
    %p159 = scmp.eq.s32.totalorder %s27, 1
    %p160 = por %p158, %p159
    %p162 = scmp.ne.s32.totalorder %s147, %s161
    %p163 = scmp.eq.s32.totalorder %s27, 0
    %p164 = por %p162, %p163
    %s166 = sadd.s32 %s165, 1
    %p169 = scmp.eq.s32.totalorder %s21, 1
    %p170 = scmp.ne.s32.totalorder %s165, %s167
    %p171 = scmp.eq.s32.totalorder %s21, 0
    %p172 = por %p170, %p171
    %p173 = scmp.ne.s32.totalorder %s165, %s167
    %p174 = scmp.eq.s32.totalorder %s26, 1
    %p175 = por %p173, %p174
    %p176 = scmp.ne.s32.totalorder %s167, %s168
    %p177 = scmp.eq.s32.totalorder %s26, 0
    %p178 = por %p176, %p177
    %p179 = scmp.ne.s32.totalorder %s167, %s168
    %p180 = scmp.eq.s32.totalorder %s27, 1
    %p181 = por %p179, %p180
    %p183 = scmp.ne.s32.totalorder %s168, %s182
    %p184 = scmp.eq.s32.totalorder %s27, 0
    %p185 = por %p183, %p184
    %s187 = sadd.s32 %s186, 1
    %p190 = scmp.eq.s32.totalorder %s21, 1
    %p191 = scmp.ne.s32.totalorder %s186, %s188
    %p192 = scmp.eq.s32.totalorder %s21, 0
    %p193 = por %p191, %p192
    %p194 = scmp.ne.s32.totalorder %s186, %s188
    %p195 = scmp.eq.s32.totalorder %s26, 1
    %p196 = por %p194, %p195
    %p197 = scmp.ne.s32.totalorder %s188, %s189
    %p198 = scmp.eq.s32.totalorder %s26, 0
    %p199 = por %p197, %p198
    %p200 = scmp.ne.s32.totalorder %s188, %s189
    %p201 = scmp.eq.s32.totalorder %s27, 1
    %p202 = por %p200, %p201
    %p204 = scmp.ne.s32.totalorder %s189, %s203
    %p205 = scmp.eq.s32.totalorder %s27, 0
    %p206 = por %p204, %p205
    %s208 = sadd.s32 %s207, 1
    %p211 = scmp.eq.s32.totalorder %s21, 1
    %p212 = scmp.ne.s32.totalorder %s207, %s209
    %p213 = scmp.eq.s32.totalorder %s21, 0
    %p214 = por %p212, %p213
    %p215 = scmp.ne.s32.totalorder %s207, %s209
    %p216 = scmp.eq.s32.totalorder %s26, 1
    %p217 = por %p215, %p216
    %p218 = scmp.ne.s32.totalorder %s209, %s210
    %p219 = scmp.eq.s32.totalorder %s26, 0
    %p220 = por %p218, %p219
    %p221 = scmp.ne.s32.totalorder %s209, %s210
    %p222 = scmp.eq.s32.totalorder %s27, 1
    %p223 = por %p221, %p222
    %p225 = scmp.ne.s32.totalorder %s210, %s224
    %p226 = scmp.eq.s32.totalorder %s27, 0
    %p227 = por %p225, %p226
    %s229 = sadd.s32 %s228, 1
    %p232 = scmp.eq.s32.totalorder %s21, 1
    %p233 = scmp.ne.s32.totalorder %s228, %s230
    %p234 = scmp.eq.s32.totalorder %s21, 0
    %p235 = por %p233, %p234
    %p236 = scmp.ne.s32.totalorder %s228, %s230
    %p237 = scmp.eq.s32.totalorder %s26, 1
    %p238 = por %p236, %p237
    %p239 = scmp.ne.s32.totalorder %s230, %s231
    %p240 = scmp.eq.s32.totalorder %s26, 0
    %p241 = por %p239, %p240
    %p242 = scmp.ne.s32.totalorder %s230, %s231
    %p243 = scmp.eq.s32.totalorder %s27, 1
    %p244 = por %p242, %p243
    %p246 = scmp.ne.s32.totalorder %s231, %s245
    %p247 = scmp.eq.s32.totalorder %s27, 0
    %p248 = por %p246, %p247
    %s250 = sadd.s32 %s249, 1
    %p253 = scmp.eq.s32.totalorder %s21, 1
    %p254 = scmp.ne.s32.totalorder %s249, %s251
    %p255 = scmp.eq.s32.totalorder %s21, 0
    %p256 = por %p254, %p255
    %p257 = scmp.ne.s32.totalorder %s249, %s251
    %p258 = scmp.eq.s32.totalorder %s26, 1
    %p259 = por %p257, %p258
    %p260 = scmp.ne.s32.totalorder %s251, %s252
    %p261 = scmp.eq.s32.totalorder %s26, 0
    %p262 = por %p260, %p261
    %p263 = scmp.ne.s32.totalorder %s251, %s252
    %p264 = scmp.eq.s32.totalorder %s27, 1
    %p265 = por %p263, %p264
    %p267 = scmp.ne.s32.totalorder %s252, %s266
    %p268 = scmp.eq.s32.totalorder %s27, 0
    %p269 = por %p267, %p268
    %s271 = sadd.s32 %s270, 1
    %p274 = scmp.eq.s32.totalorder %s21, 1
    %p275 = scmp.ne.s32.totalorder %s270, %s272
    %p276 = scmp.eq.s32.totalorder %s21, 0
    %p277 = por %p275, %p276
    %p278 = scmp.ne.s32.totalorder %s270, %s272
    %p279 = scmp.eq.s32.totalorder %s26, 1
    %p280 = por %p278, %p279
    %p281 = scmp.ne.s32.totalorder %s272, %s273
    %p282 = scmp.eq.s32.totalorder %s26, 0
    %p283 = por %p281, %p282
    %p284 = scmp.ne.s32.totalorder %s272, %s273
    %p285 = scmp.eq.s32.totalorder %s27, 1
    %p286 = por %p284, %p285
    %p288 = scmp.ne.s32.totalorder %s273, %s287
    %p289 = scmp.eq.s32.totalorder %s27, 0
    %p290 = por %p288, %p289
    %s292 = sadd.s32 %s291, 1
    %p295 = scmp.eq.s32.totalorder %s21, 1
    %p296 = scmp.ne.s32.totalorder %s291, %s293
    %p297 = scmp.eq.s32.totalorder %s21, 0
    %p298 = por %p296, %p297
    %p299 = scmp.ne.s32.totalorder %s291, %s293
    %p300 = scmp.eq.s32.totalorder %s26, 1
    %p301 = por %p299, %p300
    %p302 = scmp.ne.s32.totalorder %s293, %s294
    %p303 = scmp.eq.s32.totalorder %s26, 0
    %p304 = por %p302, %p303
    %p305 = scmp.ne.s32.totalorder %s293, %s294
    %p306 = scmp.eq.s32.totalorder %s27, 1
    %p307 = por %p305, %p306
    %p309 = scmp.ne.s32.totalorder %s294, %s308
    %p310 = scmp.eq.s32.totalorder %s27, 0
    %p311 = por %p309, %p310
    %s313 = sadd.s32 %s312, 1
    %p316 = scmp.eq.s32.totalorder %s21, 1
    %p317 = scmp.ne.s32.totalorder %s312, %s314
    %p318 = scmp.eq.s32.totalorder %s21, 0
    %p319 = por %p317, %p318
    %p320 = scmp.ne.s32.totalorder %s312, %s314
    %p321 = scmp.eq.s32.totalorder %s26, 1
    %p322 = por %p320, %p321
    %p323 = scmp.ne.s32.totalorder %s314, %s315
    %p324 = scmp.eq.s32.totalorder %s26, 0
    %p325 = por %p323, %p324
    %p326 = scmp.ne.s32.totalorder %s314, %s315
    %p327 = scmp.eq.s32.totalorder %s27, 1
    %p328 = por %p326, %p327
    %p330 = scmp.ne.s32.totalorder %s315, %s329
    %p331 = scmp.eq.s32.totalorder %s27, 0
    %p332 = por %p330, %p331
    %p333 = scmp.le.s32.totalorder 1, %s21
    %p334 = scmp.lt.s32.totalorder %s21, 3
    %p335 = pnand %p333, %p334
    %p336 = pneg %p335
    // Predicated region
    $region9: #{message_net.1} parent=5 // pred_check
      _
    $region10: #{message_net.1} parent=5 // pred_check_branch
      %338 = sbr.rel (%p335) target = $region12
    $region11: #{message_net.1} parent=5 // pred_region
      %s339 = ssub.s32 %s21, 1
      // Predicated region
      $region13: #{message_net.1} parent=11 // pred_check
        %p340 = pneg %p94
      $region14: #{message_net.1} parent=11 // pred_check_branch
        %342 = sbr.rel (%p340) target = $region16
      $region15: #{message_net.1} parent=11 // pred_region
        _
      $region16: #{message_net.1} parent=11 // pred_fallthru
        _
      // Predicated region
      $region17: #{message_net.1} parent=11 // pred_check
        %p343 = pneg %p115
      $region18: #{message_net.1} parent=11 // pred_check_branch
        %345 = sbr.rel (%p343) target = $region20
      $region19: #{message_net.1} parent=11 // pred_region
        _
      $region20: #{message_net.1} parent=11 // pred_fallthru
        _
      // Predicated region
      $region21: #{message_net.1} parent=11 // pred_check
        %p346 = pneg %p136
      $region22: #{message_net.1} parent=11 // pred_check_branch
        %348 = sbr.rel (%p346) target = $region24
      $region23: #{message_net.1} parent=11 // pred_region
        _
      $region24: #{message_net.1} parent=11 // pred_fallthru
        _
      // Predicated region
      $region25: #{message_net.1} parent=11 // pred_check
        %p349 = pneg %p157
      $region26: #{message_net.1} parent=11 // pred_check_branch
        %351 = sbr.rel (%p349) target = $region28
      $region27: #{message_net.1} parent=11 // pred_region
        _
      $region28: #{message_net.1} parent=11 // pred_fallthru
        _
      // Predicated region
      $region29: #{message_net.1} parent=11 // pred_check
        %p352 = pneg %p178
      $region30: #{message_net.1} parent=11 // pred_check_branch
        %354 = sbr.rel (%p352) target = $region32
      $region31: #{message_net.1} parent=11 // pred_region
        _
      $region32: #{message_net.1} parent=11 // pred_fallthru
        _
      // Predicated region
      $region33: #{message_net.1} parent=11 // pred_check
        %p355 = pneg %p199
      $region34: #{message_net.1} parent=11 // pred_check_branch
        %357 = sbr.rel (%p355) target = $region36
      $region35: #{message_net.1} parent=11 // pred_region
        _
      $region36: #{message_net.1} parent=11 // pred_fallthru
        _
      // Predicated region
      $region37: #{message_net.1} parent=11 // pred_check
        %p358 = pneg %p220
      $region38: #{message_net.1} parent=11 // pred_check_branch
        %360 = sbr.rel (%p358) target = $region40
      $region39: #{message_net.1} parent=11 // pred_region
        _
      $region40: #{message_net.1} parent=11 // pred_fallthru
        _
      // Predicated region
      $region41: #{message_net.1} parent=11 // pred_check
        %p361 = pneg %p241
      $region42: #{message_net.1} parent=11 // pred_check_branch
        %363 = sbr.rel (%p361) target = $region44
      $region43: #{message_net.1} parent=11 // pred_region
        _
      $region44: #{message_net.1} parent=11 // pred_fallthru
        _
      // Predicated region
      $region45: #{message_net.1} parent=11 // pred_check
        %p364 = pneg %p262
      $region46: #{message_net.1} parent=11 // pred_check_branch
        %366 = sbr.rel (%p364) target = $region48
      $region47: #{message_net.1} parent=11 // pred_region
        _
      $region48: #{message_net.1} parent=11 // pred_fallthru
        _
      // Predicated region
      $region49: #{message_net.1} parent=11 // pred_check
        %p367 = pneg %p283
      $region50: #{message_net.1} parent=11 // pred_check_branch
        %369 = sbr.rel (%p367) target = $region52
      $region51: #{message_net.1} parent=11 // pred_region
        _
      $region52: #{message_net.1} parent=11 // pred_fallthru
        _
      // Predicated region
      $region53: #{message_net.1} parent=11 // pred_check
        %p370 = pneg %p304
      $region54: #{message_net.1} parent=11 // pred_check_branch
        %372 = sbr.rel (%p370) target = $region56
      $region55: #{message_net.1} parent=11 // pred_region
        _
      $region56: #{message_net.1} parent=11 // pred_fallthru
        _
    $region12: #{message_net.1} parent=5 // pred_fallthru
      _
    %p373 = scmp.lt.s32.totalorder %s21, 2
    // Predicated region
    $region57: #{message_net.1} parent=5 // pred_check
      %p374 = pneg %p373
    $region58: #{message_net.1} parent=5 // pred_check_branch
      %376 = sbr.rel (%p374) target = $region60
    $region59: #{message_net.1} parent=5 // pred_region
      // Predicated region
      $region61: #{message_net.1} parent=59 // pred_check
        %p377 = pneg %p41
      $region62: #{message_net.1} parent=59 // pred_check_branch
        %379 = sbr.rel (%p377) target = $region64
      $region63: #{message_net.1} parent=59 // pred_region
        %s380 = smul.u32 32, %s21
        %p381 = scmp.lt.s32.totalorder %s380, 63
        %s382 = scalar_select %p381, %s380, 63
        %s383 = smul.addr %s382, 8
        %s384 = scalar_lea.vmem %s0, %s383
        %s385 = smul.u32 32, %s21
      $region64: #{message_net.1} parent=59 // pred_fallthru
        _
      // Predicated region
      $region65: #{message_net.1} parent=59 // pred_check
        %p386 = pneg %p67
      $region66: #{message_net.1} parent=59 // pred_check_branch
        %388 = sbr.rel (%p386) target = $region68
      $region67: #{message_net.1} parent=59 // pred_region
        %s389 = smul.u32 32, %s21
        %p390 = scmp.lt.s32.totalorder %s389, 63
        %s391 = scalar_select %p390, %s389, 63
        %s392 = smul.addr %s391, 8
        %s393 = scalar_lea.vmem %s1, %s392
        %s394 = smul.u32 32, %s21
      $region68: #{message_net.1} parent=59 // pred_fallthru
        _
    $region60: #{message_net.1} parent=5 // pred_fallthru
      _
    %p395 = scmp.le.s32.totalorder 1, %s21
    %p396 = scmp.lt.s32.totalorder %s21, 3
    %p397 = pnand %p395, %p396
    %p398 = pneg %p397
    // Predicated region
    $region69: #{message_net.1} parent=5 // pred_check
      _
    $region70: #{message_net.1} parent=5 // pred_check_branch
      %400 = sbr.rel (%p397) target = $region72
    $region71: #{message_net.1} parent=5 // pred_region
      %s401 = ssub.s32 %s21, 1
      %s402 = smul.u32 32, %s26
      %p403 = scmp.lt.s32.totalorder %s402, 63
      %s404 = scalar_select %p403, %s402, 63
      %s405 = smul.addr %s404, 8
      %s406 = scalar_lea.vmem %s0, %s405
      %p407 = pneg %p47
      %p408 = pneg %p44
      %s409 = smul.u32 32, %s26
      %p410 = scmp.lt.s32.totalorder %s409, 63
      %s411 = scalar_select %p410, %s409, 63
      %s412 = smul.addr %s411, 8
      %s413 = scalar_lea.vmem %s1, %s412
      %p414 = pneg %p73
      %p415 = pneg %p70
      %p416 = pneg %p94
      %p417 = pneg %p91
      %p418 = pneg %p115
      %p419 = pneg %p112
      %p420 = pneg %p136
      %p421 = pneg %p133
      %p422 = pneg %p157
      %p423 = pneg %p154
      %p424 = pneg %p178
      %p425 = pneg %p175
      %p426 = pneg %p199
      %p427 = pneg %p196
      %p428 = pneg %p220
      %p429 = pneg %p217
      %p430 = pneg %p241
      %p431 = pneg %p238
      %p432 = pneg %p262
      %p433 = pneg %p259
      %p434 = pneg %p283
      %p435 = pneg %p280
      %p436 = pneg %p304
      %p437 = pneg %p301
      %p438 = pneg %p325
      %p439 = pneg %p322
      %s440 = smul.u32 32, %s26
      %p441 = scmp.lt.s32.totalorder %s440, 63
      %s442 = scalar_select %p441, %s440, 63
      %s443 = smul.addr %s442, 8
      %s444 = scalar_lea.vmem %s0, %s443
      %s445 = smul.u32 32, %s26
      %s446 = smul.u32 32, %s26
      %p447 = scmp.lt.s32.totalorder %s446, 63
      %s448 = scalar_select %p447, %s446, 63
      %s449 = smul.addr %s448, 8
      %s450 = scalar_lea.vmem %s1, %s449
      %s451 = smul.u32 32, %s26
      %p453 = scmp.eq.s32.totalorder %s26, 0
      // Predicated region
      $region73: #{message_net.1} parent=71 // pred_check
        %p454 = pneg %p453
      $region74: #{message_net.1} parent=71 // pred_check_branch
        %456 = sbr.rel (%p454) target = $region76
      $region75: #{message_net.1} parent=71 // pred_region
        %vm457 = vcmask 130048
        %458 = vst.msk [vmem:[#allocation2] sm:$0xff] %vm457, 0.0
        %459 = vst.msk [vmem:[#allocation2 + $0x8] sm:$0xff] %vm457, 0.0
        %460 = vst.msk [vmem:[#allocation2 + $0x10] sm:$0xff] %vm457, 0.0
        %461 = vst.msk [vmem:[#allocation2 + $0x18] sm:$0xff] %vm457, 0.0
      $region76: #{message_net.1} parent=71 // pred_fallthru
        _
      %v462 = vld [vmem:[%s2] sm:$0xff]
      %v463 = vld [vmem:[%s2 + $0x8] sm:$0xff]
      %v464 = vld [vmem:[%s2 + $0x10] sm:$0xff]
      %v465 = vld [vmem:[%s2 + $0x18] sm:$0xff]
      %v466 = vld [vmem:[%s444] sm:$0xff]
      %v467 = vld [vmem:[%s444 + $0x8] sm:$0xff]
      %v468 = vld [vmem:[%s444 + $0x10] sm:$0xff]
      %v469 = vld [vmem:[%s444 + $0x18] sm:$0xff]
      %v470 = vld [vmem:[%s444 + $0x20] sm:$0xff]
      %v471 = vld [vmem:[%s444 + $0x28] sm:$0xff]
      %v472 = vld [vmem:[%s444 + $0x30] sm:$0xff]
      %v473 = vld [vmem:[%s444 + $0x38] sm:$0xff]
      %v474 = vld [vmem:[%s444 + $0x40] sm:$0xff]
      %v475 = vld [vmem:[%s444 + $0x48] sm:$0xff]
      %v476 = vld [vmem:[%s444 + $0x50] sm:$0xff]
      %v477 = vld [vmem:[%s444 + $0x58] sm:$0xff]
      %v478 = vld [vmem:[%s444 + $0x60] sm:$0xff]
      %v479 = vld [vmem:[%s444 + $0x68] sm:$0xff]
      %v480 = vld [vmem:[%s444 + $0x70] sm:$0xff]
      %v481 = vld [vmem:[%s444 + $0x78] sm:$0xff]
      %v482 = vld [vmem:[%s444 + $0x80] sm:$0xff]
      %v483 = vld [vmem:[%s444 + $0x88] sm:$0xff]
      %v484 = vld [vmem:[%s444 + $0x90] sm:$0xff]
      %v485 = vld [vmem:[%s444 + $0x98] sm:$0xff]
      %v486 = vld [vmem:[%s444 + $0xa0] sm:$0xff]
      %v487 = vld [vmem:[%s444 + $0xa8] sm:$0xff]
      %v488 = vld [vmem:[%s444 + $0xb0] sm:$0xff]
      %v489 = vld [vmem:[%s444 + $0xb8] sm:$0xff]
      %v490 = vld [vmem:[%s444 + $0xc0] sm:$0xff]
      %v491 = vld [vmem:[%s444 + $0xc8] sm:$0xff]
      %v492 = vld [vmem:[%s444 + $0xd0] sm:$0xff]
      %v493 = vld [vmem:[%s444 + $0xd8] sm:$0xff]
      %v494 = vld [vmem:[%s444 + $0xe0] sm:$0xff]
      %v495 = vld [vmem:[%s444 + $0xe8] sm:$0xff]
      %v496 = vld [vmem:[%s444 + $0xf0] sm:$0xff]
      %v497 = vld [vmem:[%s444 + $0xf8] sm:$0xff]
      %v498 = vld [vmem:[%s450] sm:$0xff]
      %v499 = vld [vmem:[%s450 + $0x8] sm:$0xff]
      %v500 = vld [vmem:[%s450 + $0x10] sm:$0xff]
      %v501 = vld [vmem:[%s450 + $0x18] sm:$0xff]
      %v502 = vld [vmem:[%s450 + $0x20] sm:$0xff]
      %v503 = vld [vmem:[%s450 + $0x28] sm:$0xff]
      %v504 = vld [vmem:[%s450 + $0x30] sm:$0xff]
      %v505 = vld [vmem:[%s450 + $0x38] sm:$0xff]
      %v506 = vld [vmem:[%s450 + $0x40] sm:$0xff]
      %v507 = vld [vmem:[%s450 + $0x48] sm:$0xff]
      %v508 = vld [vmem:[%s450 + $0x50] sm:$0xff]
      %v509 = vld [vmem:[%s450 + $0x58] sm:$0xff]
      %v510 = vld [vmem:[%s450 + $0x60] sm:$0xff]
      %v511 = vld [vmem:[%s450 + $0x68] sm:$0xff]
      %v512 = vld [vmem:[%s450 + $0x70] sm:$0xff]
      %v513 = vld [vmem:[%s450 + $0x78] sm:$0xff]
      %v514 = vld [vmem:[%s450 + $0x80] sm:$0xff]
      %v515 = vld [vmem:[%s450 + $0x88] sm:$0xff]
      %v516 = vld [vmem:[%s450 + $0x90] sm:$0xff]
      %v517 = vld [vmem:[%s450 + $0x98] sm:$0xff]
      %v518 = vld [vmem:[%s450 + $0xa0] sm:$0xff]
      %v519 = vld [vmem:[%s450 + $0xa8] sm:$0xff]
      %v520 = vld [vmem:[%s450 + $0xb0] sm:$0xff]
      %v521 = vld [vmem:[%s450 + $0xb8] sm:$0xff]
      %v522 = vld [vmem:[%s450 + $0xc0] sm:$0xff]
      %v523 = vld [vmem:[%s450 + $0xc8] sm:$0xff]
      %v524 = vld [vmem:[%s450 + $0xd0] sm:$0xff]
      %v525 = vld [vmem:[%s450 + $0xd8] sm:$0xff]
      %v526 = vld [vmem:[%s450 + $0xe0] sm:$0xff]
      %v527 = vld [vmem:[%s450 + $0xe8] sm:$0xff]
      %v528 = vld [vmem:[%s450 + $0xf0] sm:$0xff]
      %v529 = vld [vmem:[%s450 + $0xf8] sm:$0xff]
      %v530 = vlaneseq
      %v531 = vand.u32 %v530, 127
      %532 = vset.pattern.permute.xlu0 0
      %533 = vperm.xlu0 %532, %v466
      %v534 = vpop.permute.xlu0 %533
      %535 = vset.pattern.permute.xlu0 0
      %536 = vperm.xlu0 %535, %v467
      %v537 = vpop.permute.xlu0 %536
      %538 = vset.pattern.permute.xlu0 0
      %539 = vperm.xlu0 %538, %v468
      %v540 = vpop.permute.xlu0 %539
      %541 = vset.pattern.permute.xlu0 0
      %542 = vperm.xlu0 %541, %v469
      %v543 = vpop.permute.xlu0 %542
      %544 = vset.pattern.permute.xlu0 0
      %545 = vperm.xlu0 %544, %v470
      %v546 = vpop.permute.xlu0 %545
      %547 = vset.pattern.permute.xlu0 0
      %548 = vperm.xlu0 %547, %v471
      %v549 = vpop.permute.xlu0 %548
      %550 = vset.pattern.permute.xlu0 0
      %551 = vperm.xlu0 %550, %v472
      %v552 = vpop.permute.xlu0 %551
      %553 = vset.pattern.permute.xlu0 0
      %554 = vperm.xlu0 %553, %v473
      %v555 = vpop.permute.xlu0 %554
      %556 = vset.pattern.permute.xlu0 0
      %557 = vperm.xlu0 %556, %v474
      %v558 = vpop.permute.xlu0 %557
      %559 = vset.pattern.permute.xlu0 0
      %560 = vperm.xlu0 %559, %v475
      %v561 = vpop.permute.xlu0 %560
      %562 = vset.pattern.permute.xlu0 0
      %563 = vperm.xlu0 %562, %v476
      %v564 = vpop.permute.xlu0 %563
      %565 = vset.pattern.permute.xlu0 0
      %566 = vperm.xlu0 %565, %v477
      %v567 = vpop.permute.xlu0 %566
      %568 = vset.pattern.permute.xlu0 0
      %569 = vperm.xlu0 %568, %v478
      %v570 = vpop.permute.xlu0 %569
      %571 = vset.pattern.permute.xlu0 0
      %572 = vperm.xlu0 %571, %v479
      %v573 = vpop.permute.xlu0 %572
      %574 = vset.pattern.permute.xlu0 0
      %575 = vperm.xlu0 %574, %v480
      %v576 = vpop.permute.xlu0 %575
      %577 = vset.pattern.permute.xlu0 0
      %578 = vperm.xlu0 %577, %v481
      %v579 = vpop.permute.xlu0 %578
      %580 = vset.pattern.permute.xlu0 0
      %581 = vperm.xlu0 %580, %v482
      %v582 = vpop.permute.xlu0 %581
      %583 = vset.pattern.permute.xlu0 0
      %584 = vperm.xlu0 %583, %v483
      %v585 = vpop.permute.xlu0 %584
      %586 = vset.pattern.permute.xlu0 0
      %587 = vperm.xlu0 %586, %v484
      %v588 = vpop.permute.xlu0 %587
      %589 = vset.pattern.permute.xlu0 0
      %590 = vperm.xlu0 %589, %v485
      %v591 = vpop.permute.xlu0 %590
      %592 = vset.pattern.permute.xlu0 0
      %593 = vperm.xlu0 %592, %v486
      %v594 = vpop.permute.xlu0 %593
      %595 = vset.pattern.permute.xlu0 0
      %596 = vperm.xlu0 %595, %v487
      %v597 = vpop.permute.xlu0 %596
      %598 = vset.pattern.permute.xlu0 0
      %599 = vperm.xlu0 %598, %v488
      %v600 = vpop.permute.xlu0 %599
      %601 = vset.pattern.permute.xlu0 0
      %602 = vperm.xlu0 %601, %v489
      %v603 = vpop.permute.xlu0 %602
      %604 = vset.pattern.permute.xlu0 0
      %605 = vperm.xlu0 %604, %v490
      %v606 = vpop.permute.xlu0 %605
      %607 = vset.pattern.permute.xlu0 0
      %608 = vperm.xlu0 %607, %v491
      %v609 = vpop.permute.xlu0 %608
      %610 = vset.pattern.permute.xlu0 0
      %611 = vperm.xlu0 %610, %v492
      %v612 = vpop.permute.xlu0 %611
      %613 = vset.pattern.permute.xlu0 0
      %614 = vperm.xlu0 %613, %v493
      %v615 = vpop.permute.xlu0 %614
      %616 = vset.pattern.permute.xlu0 0
      %617 = vperm.xlu0 %616, %v494
      %v618 = vpop.permute.xlu0 %617
      %619 = vset.pattern.permute.xlu0 0
      %620 = vperm.xlu0 %619, %v495
      %v621 = vpop.permute.xlu0 %620
      %622 = vset.pattern.permute.xlu0 0
      %623 = vperm.xlu0 %622, %v496
      %v624 = vpop.permute.xlu0 %623
      %625 = vset.pattern.permute.xlu0 0
      %626 = vperm.xlu0 %625, %v497
      %v627 = vpop.permute.xlu0 %626
      %vm628 = vcmp.eq.s32.totalorder %v534, %v531
      %vm629 = vcmp.eq.s32.totalorder %v537, %v531
      %vm630 = vcmp.eq.s32.totalorder %v540, %v531
      %vm631 = vcmp.eq.s32.totalorder %v543, %v531
      %vm632 = vcmp.eq.s32.totalorder %v546, %v531
      %vm633 = vcmp.eq.s32.totalorder %v549, %v531
      %vm634 = vcmp.eq.s32.totalorder %v552, %v531
      %vm635 = vcmp.eq.s32.totalorder %v555, %v531
      %vm636 = vcmp.eq.s32.totalorder %v558, %v531
      %vm637 = vcmp.eq.s32.totalorder %v561, %v531
      %vm638 = vcmp.eq.s32.totalorder %v564, %v531
      %vm639 = vcmp.eq.s32.totalorder %v567, %v531
      %vm640 = vcmp.eq.s32.totalorder %v570, %v531
      %vm641 = vcmp.eq.s32.totalorder %v573, %v531
      %vm642 = vcmp.eq.s32.totalorder %v576, %v531
      %vm643 = vcmp.eq.s32.totalorder %v579, %v531
      %vm644 = vcmp.eq.s32.totalorder %v582, %v531
      %vm645 = vcmp.eq.s32.totalorder %v585, %v531
      %vm646 = vcmp.eq.s32.totalorder %v588, %v531
      %vm647 = vcmp.eq.s32.totalorder %v591, %v531
      %vm648 = vcmp.eq.s32.totalorder %v594, %v531
      %vm649 = vcmp.eq.s32.totalorder %v597, %v531
      %vm650 = vcmp.eq.s32.totalorder %v600, %v531
      %vm651 = vcmp.eq.s32.totalorder %v603, %v531
      %vm652 = vcmp.eq.s32.totalorder %v606, %v531
      %vm653 = vcmp.eq.s32.totalorder %v609, %v531
      %vm654 = vcmp.eq.s32.totalorder %v612, %v531
      %vm655 = vcmp.eq.s32.totalorder %v615, %v531
      %vm656 = vcmp.eq.s32.totalorder %v618, %v531
      %vm657 = vcmp.eq.s32.totalorder %v621, %v531
      %vm658 = vcmp.eq.s32.totalorder %v624, %v531
      %vm659 = vcmp.eq.s32.totalorder %v627, %v531
      %v660 = vsel %vm628, 1, 0
      %v661 = vsel %vm629, 1, 0
      %v662 = vsel %vm630, 1, 0
      %v663 = vsel %vm631, 1, 0
      %v664 = vsel %vm632, 1, 0
      %v665 = vsel %vm633, 1, 0
      %v666 = vsel %vm634, 1, 0
      %v667 = vsel %vm635, 1, 0
      %v668 = vsel %vm636, 1, 0
      %v669 = vsel %vm637, 1, 0
      %v670 = vsel %vm638, 1, 0
      %v671 = vsel %vm639, 1, 0
      %v672 = vsel %vm640, 1, 0
      %v673 = vsel %vm641, 1, 0
      %v674 = vsel %vm642, 1, 0
      %v675 = vsel %vm643, 1, 0
      %v676 = vsel %vm644, 1, 0
      %v677 = vsel %vm645, 1, 0
      %v678 = vsel %vm646, 1, 0
      %v679 = vsel %vm647, 1, 0
      %v680 = vsel %vm648, 1, 0
      %v681 = vsel %vm649, 1, 0
      %v682 = vsel %vm650, 1, 0
      %v683 = vsel %vm651, 1, 0
      %v684 = vsel %vm652, 1, 0
      %v685 = vsel %vm653, 1, 0
      %v686 = vsel %vm654, 1, 0
      %v687 = vsel %vm655, 1, 0
      %v688 = vsel %vm656, 1, 0
      %v689 = vsel %vm657, 1, 0
      %v690 = vsel %vm658, 1, 0
      %v691 = vsel %vm659, 1, 0
      %v692 = vcvt.s32.f32 %v660
      %v693 = vcvt.s32.f32 %v661
      %v694 = vcvt.s32.f32 %v662
      %v695 = vcvt.s32.f32 %v663
      %v696 = vcvt.s32.f32 %v664
      %v697 = vcvt.s32.f32 %v665
      %v698 = vcvt.s32.f32 %v666
      %v699 = vcvt.s32.f32 %v667
      %v700 = vcvt.s32.f32 %v668
      %v701 = vcvt.s32.f32 %v669
      %v702 = vcvt.s32.f32 %v670
      %v703 = vcvt.s32.f32 %v671
      %v704 = vcvt.s32.f32 %v672
      %v705 = vcvt.s32.f32 %v673
      %v706 = vcvt.s32.f32 %v674
      %v707 = vcvt.s32.f32 %v675
      %v708 = vcvt.s32.f32 %v676
      %v709 = vcvt.s32.f32 %v677
      %v710 = vcvt.s32.f32 %v678
      %v711 = vcvt.s32.f32 %v679
      %v712 = vcvt.s32.f32 %v680
      %v713 = vcvt.s32.f32 %v681
      %v714 = vcvt.s32.f32 %v682
      %v715 = vcvt.s32.f32 %v683
      %v716 = vcvt.s32.f32 %v684
      %v717 = vcvt.s32.f32 %v685
      %v718 = vcvt.s32.f32 %v686
      %v719 = vcvt.s32.f32 %v687
      %v720 = vcvt.s32.f32 %v688
      %v721 = vcvt.s32.f32 %v689
      %v722 = vcvt.s32.f32 %v690
      %v723 = vcvt.s32.f32 %v691
      %724 = vset.pattern.permute.xlu0 0
      %725 = vperm.xlu0 %724, %v498
      %v726 = vpop.permute.xlu0 %725
      %727 = vset.pattern.permute.xlu0 0
      %728 = vperm.xlu0 %727, %v499
      %v729 = vpop.permute.xlu0 %728
      %730 = vset.pattern.permute.xlu0 0
      %731 = vperm.xlu0 %730, %v500
      %v732 = vpop.permute.xlu0 %731
      %733 = vset.pattern.permute.xlu0 0
      %734 = vperm.xlu0 %733, %v501
      %v735 = vpop.permute.xlu0 %734
      %736 = vset.pattern.permute.xlu0 0
      %737 = vperm.xlu0 %736, %v502
      %v738 = vpop.permute.xlu0 %737
      %739 = vset.pattern.permute.xlu0 0
      %740 = vperm.xlu0 %739, %v503
      %v741 = vpop.permute.xlu0 %740
      %742 = vset.pattern.permute.xlu0 0
      %743 = vperm.xlu0 %742, %v504
      %v744 = vpop.permute.xlu0 %743
      %745 = vset.pattern.permute.xlu0 0
      %746 = vperm.xlu0 %745, %v505
      %v747 = vpop.permute.xlu0 %746
      %748 = vset.pattern.permute.xlu0 0
      %749 = vperm.xlu0 %748, %v506
      %v750 = vpop.permute.xlu0 %749
      %751 = vset.pattern.permute.xlu0 0
      %752 = vperm.xlu0 %751, %v507
      %v753 = vpop.permute.xlu0 %752
      %754 = vset.pattern.permute.xlu0 0
      %755 = vperm.xlu0 %754, %v508
      %v756 = vpop.permute.xlu0 %755
      %757 = vset.pattern.permute.xlu0 0
      %758 = vperm.xlu0 %757, %v509
      %v759 = vpop.permute.xlu0 %758
      %760 = vset.pattern.permute.xlu0 0
      %761 = vperm.xlu0 %760, %v510
      %v762 = vpop.permute.xlu0 %761
      %763 = vset.pattern.permute.xlu0 0
      %764 = vperm.xlu0 %763, %v511
      %v765 = vpop.permute.xlu0 %764
      %766 = vset.pattern.permute.xlu0 0
      %767 = vperm.xlu0 %766, %v512
      %v768 = vpop.permute.xlu0 %767
      %769 = vset.pattern.permute.xlu0 0
      %770 = vperm.xlu0 %769, %v513
      %v771 = vpop.permute.xlu0 %770
      %772 = vset.pattern.permute.xlu0 0
      %773 = vperm.xlu0 %772, %v514
      %v774 = vpop.permute.xlu0 %773
      %775 = vset.pattern.permute.xlu0 0
      %776 = vperm.xlu0 %775, %v515
      %v777 = vpop.permute.xlu0 %776
      %778 = vset.pattern.permute.xlu0 0
      %779 = vperm.xlu0 %778, %v516
      %v780 = vpop.permute.xlu0 %779
      %781 = vset.pattern.permute.xlu0 0
      %782 = vperm.xlu0 %781, %v517
      %v783 = vpop.permute.xlu0 %782
      %784 = vset.pattern.permute.xlu0 0
      %785 = vperm.xlu0 %784, %v518
      %v786 = vpop.permute.xlu0 %785
      %787 = vset.pattern.permute.xlu0 0
      %788 = vperm.xlu0 %787, %v519
      %v789 = vpop.permute.xlu0 %788
      %790 = vset.pattern.permute.xlu0 0
      %791 = vperm.xlu0 %790, %v520
      %v792 = vpop.permute.xlu0 %791
      %793 = vset.pattern.permute.xlu0 0
      %794 = vperm.xlu0 %793, %v521
      %v795 = vpop.permute.xlu0 %794
      %796 = vset.pattern.permute.xlu0 0
      %797 = vperm.xlu0 %796, %v522
      %v798 = vpop.permute.xlu0 %797
      %799 = vset.pattern.permute.xlu0 0
      %800 = vperm.xlu0 %799, %v523
      %v801 = vpop.permute.xlu0 %800
      %802 = vset.pattern.permute.xlu0 0
      %803 = vperm.xlu0 %802, %v524
      %v804 = vpop.permute.xlu0 %803
      %805 = vset.pattern.permute.xlu0 0
      %806 = vperm.xlu0 %805, %v525
      %v807 = vpop.permute.xlu0 %806
      %808 = vset.pattern.permute.xlu0 0
      %809 = vperm.xlu0 %808, %v526
      %v810 = vpop.permute.xlu0 %809
      %811 = vset.pattern.permute.xlu0 0
      %812 = vperm.xlu0 %811, %v527
      %v813 = vpop.permute.xlu0 %812
      %814 = vset.pattern.permute.xlu0 0
      %815 = vperm.xlu0 %814, %v528
      %v816 = vpop.permute.xlu0 %815
      %817 = vset.pattern.permute.xlu0 0
      %818 = vperm.xlu0 %817, %v529
      %v819 = vpop.permute.xlu0 %818
      %vm820 = vcmp.eq.s32.totalorder %v726, %v531
      %vm821 = vcmp.eq.s32.totalorder %v729, %v531
      %vm822 = vcmp.eq.s32.totalorder %v732, %v531
      %vm823 = vcmp.eq.s32.totalorder %v735, %v531
      %vm824 = vcmp.eq.s32.totalorder %v738, %v531
      %vm825 = vcmp.eq.s32.totalorder %v741, %v531
      %vm826 = vcmp.eq.s32.totalorder %v744, %v531
      %vm827 = vcmp.eq.s32.totalorder %v747, %v531
      %vm828 = vcmp.eq.s32.totalorder %v750, %v531
      %vm829 = vcmp.eq.s32.totalorder %v753, %v531
      %vm830 = vcmp.eq.s32.totalorder %v756, %v531
      %vm831 = vcmp.eq.s32.totalorder %v759, %v531
      %vm832 = vcmp.eq.s32.totalorder %v762, %v531
      %vm833 = vcmp.eq.s32.totalorder %v765, %v531
      %vm834 = vcmp.eq.s32.totalorder %v768, %v531
      %vm835 = vcmp.eq.s32.totalorder %v771, %v531
      %vm836 = vcmp.eq.s32.totalorder %v774, %v531
      %vm837 = vcmp.eq.s32.totalorder %v777, %v531
      %vm838 = vcmp.eq.s32.totalorder %v780, %v531
      %vm839 = vcmp.eq.s32.totalorder %v783, %v531
      %vm840 = vcmp.eq.s32.totalorder %v786, %v531
      %vm841 = vcmp.eq.s32.totalorder %v789, %v531
      %vm842 = vcmp.eq.s32.totalorder %v792, %v531
      %vm843 = vcmp.eq.s32.totalorder %v795, %v531
      %vm844 = vcmp.eq.s32.totalorder %v798, %v531
      %vm845 = vcmp.eq.s32.totalorder %v801, %v531
      %vm846 = vcmp.eq.s32.totalorder %v804, %v531
      %vm847 = vcmp.eq.s32.totalorder %v807, %v531
      %vm848 = vcmp.eq.s32.totalorder %v810, %v531
      %vm849 = vcmp.eq.s32.totalorder %v813, %v531
      %vm850 = vcmp.eq.s32.totalorder %v816, %v531
      %vm851 = vcmp.eq.s32.totalorder %v819, %v531
      %v852 = vsel %vm820, 1, 0
      %v853 = vsel %vm821, 1, 0
      %v854 = vsel %vm822, 1, 0
      %v855 = vsel %vm823, 1, 0
      %v856 = vsel %vm824, 1, 0
      %v857 = vsel %vm825, 1, 0
      %v858 = vsel %vm826, 1, 0
      %v859 = vsel %vm827, 1, 0
      %v860 = vsel %vm828, 1, 0
      %v861 = vsel %vm829, 1, 0
      %v862 = vsel %vm830, 1, 0
      %v863 = vsel %vm831, 1, 0
      %v864 = vsel %vm832, 1, 0
      %v865 = vsel %vm833, 1, 0
      %v866 = vsel %vm834, 1, 0
      %v867 = vsel %vm835, 1, 0
      %v868 = vsel %vm836, 1, 0
      %v869 = vsel %vm837, 1, 0
      %v870 = vsel %vm838, 1, 0
      %v871 = vsel %vm839, 1, 0
      %v872 = vsel %vm840, 1, 0
      %v873 = vsel %vm841, 1, 0
      %v874 = vsel %vm842, 1, 0
      %v875 = vsel %vm843, 1, 0
      %v876 = vsel %vm844, 1, 0
      %v877 = vsel %vm845, 1, 0
      %v878 = vsel %vm846, 1, 0
      %v879 = vsel %vm847, 1, 0
      %v880 = vsel %vm848, 1, 0
      %v881 = vsel %vm849, 1, 0
      %v882 = vsel %vm850, 1, 0
      %v883 = vsel %vm851, 1, 0
      %v884 = vcvt.s32.f32 %v852
      %v885 = vcvt.s32.f32 %v853
      %v886 = vcvt.s32.f32 %v854
      %v887 = vcvt.s32.f32 %v855
      %v888 = vcvt.s32.f32 %v856
      %v889 = vcvt.s32.f32 %v857
      %v890 = vcvt.s32.f32 %v858
      %v891 = vcvt.s32.f32 %v859
      %v892 = vcvt.s32.f32 %v860
      %v893 = vcvt.s32.f32 %v861
      %v894 = vcvt.s32.f32 %v862
      %v895 = vcvt.s32.f32 %v863
      %v896 = vcvt.s32.f32 %v864
      %v897 = vcvt.s32.f32 %v865
      %v898 = vcvt.s32.f32 %v866
      %v899 = vcvt.s32.f32 %v867
      %v900 = vcvt.s32.f32 %v868
      %v901 = vcvt.s32.f32 %v869
      %v902 = vcvt.s32.f32 %v870
      %v903 = vcvt.s32.f32 %v871
      %v904 = vcvt.s32.f32 %v872
      %v905 = vcvt.s32.f32 %v873
      %v906 = vcvt.s32.f32 %v874
      %v907 = vcvt.s32.f32 %v875
      %v908 = vcvt.s32.f32 %v876
      %v909 = vcvt.s32.f32 %v877
      %v910 = vcvt.s32.f32 %v878
      %v911 = vcvt.s32.f32 %v879
      %v912 = vcvt.s32.f32 %v880
      %v913 = vcvt.s32.f32 %v881
      %v914 = vcvt.s32.f32 %v882
      %v915 = vcvt.s32.f32 %v883
      %vm916 = vcmask 261120
      %v918 = vsel %vm916, %v692, 0
      %v921 = vsel %vm916, %v693, 0
      %v924 = vsel %vm916, %v694, 0
      %v927 = vsel %vm916, %v695, 0
      %v930 = vsel %vm916, %v696, 0
      %v933 = vsel %vm916, %v697, 0
      %v936 = vsel %vm916, %v698, 0
      %v939 = vsel %vm916, %v699, 0
      %v942 = vsel %vm916, %v700, 0
      %v945 = vsel %vm916, %v701, 0
      %v948 = vsel %vm916, %v702, 0
      %v951 = vsel %vm916, %v703, 0
      %v954 = vsel %vm916, %v704, 0
      %v957 = vsel %vm916, %v705, 0
      %v960 = vsel %vm916, %v706, 0
      %v963 = vsel %vm916, %v707, 0
      %v966 = vsel %vm916, %v708, 0
      %v969 = vsel %vm916, %v709, 0
      %v972 = vsel %vm916, %v710, 0
      %v975 = vsel %vm916, %v711, 0
      %v978 = vsel %vm916, %v712, 0
      %v981 = vsel %vm916, %v713, 0
      %v984 = vsel %vm916, %v714, 0
      %v987 = vsel %vm916, %v715, 0
      %v990 = vsel %vm916, %v716, 0
      %v993 = vsel %vm916, %v717, 0
      %v996 = vsel %vm916, %v718, 0
      %v999 = vsel %vm916, %v719, 0
      %v1002 = vsel %vm916, %v720, 0
      %v1005 = vsel %vm916, %v721, 0
      %v1008 = vsel %vm916, %v722, 0
      %v1011 = vsel %vm916, %v723, 0
      %1013 = vmatpush.msra.mxu0 0.0
      %1014 = vmatpush.msra.mxu0 0.0
      %1015 = vmatpush.msra.mxu0 0.0
      %1016 = vmatpush.msra.mxu0 0.0
      %1017 = vmatpush.msra.mxu0 0.0
      %1018 = vmatpush.msra.mxu0 0.0
      %1019 = vmatpush.msra.mxu0 0.0
      %1020 = vmatpush.msra.mxu0 0.0
      %1021 = vmatpush.msra.mxu0 0.0
      %1022 = vmatpush.msra.mxu0 0.0
      %1023 = vmatpush.msra.mxu0 0.0
      %1024 = vmatpush.msra.mxu0 0.0
      %1025 = vmatpush.msra.mxu0 %v465
      %1026 = vmatpush.msra.mxu0 %v464
      %1027 = vmatpush.msra.mxu0 %v463
      %1028 = vmatpush.msra.mxu0 %v462
      %1029 = vmatmul.f32.gmra.mxu0 %v918
      %v1030 = vpop.f32.mrf.mxu0
      %v1031 = vadd.f32 0.0, %v1030
      %1032 = vmatmul.f32.gmra.mxu0 %v921
      %v1033 = vpop.f32.mrf.mxu0
      %v1034 = vadd.f32 0.0, %v1033
      %1035 = vmatmul.f32.gmra.mxu0 %v924
      %v1036 = vpop.f32.mrf.mxu0
      %v1037 = vadd.f32 0.0, %v1036
      %1038 = vmatmul.f32.gmra.mxu0 %v927
      %v1039 = vpop.f32.mrf.mxu0
      %v1040 = vadd.f32 0.0, %v1039
      %1041 = vmatmul.f32.gmra.mxu0 %v930
      %v1042 = vpop.f32.mrf.mxu0
      %v1043 = vadd.f32 0.0, %v1042
      %1044 = vmatmul.f32.gmra.mxu0 %v933
      %v1045 = vpop.f32.mrf.mxu0
      %v1046 = vadd.f32 0.0, %v1045
      %1047 = vmatmul.f32.gmra.mxu0 %v936
      %v1048 = vpop.f32.mrf.mxu0
      %v1049 = vadd.f32 0.0, %v1048
      %1050 = vmatmul.f32.gmra.mxu0 %v939
      %v1051 = vpop.f32.mrf.mxu0
      %v1052 = vadd.f32 0.0, %v1051
      %1053 = vmatmul.f32.gmra.mxu0 %v942
      %v1054 = vpop.f32.mrf.mxu0
      %v1055 = vadd.f32 0.0, %v1054
      %1056 = vmatmul.f32.gmra.mxu0 %v945
      %v1057 = vpop.f32.mrf.mxu0
      %v1058 = vadd.f32 0.0, %v1057
      %1059 = vmatmul.f32.gmra.mxu0 %v948
      %v1060 = vpop.f32.mrf.mxu0
      %v1061 = vadd.f32 0.0, %v1060
      %1062 = vmatmul.f32.gmra.mxu0 %v951
      %v1063 = vpop.f32.mrf.mxu0
      %v1064 = vadd.f32 0.0, %v1063
      %1065 = vmatmul.f32.gmra.mxu0 %v954
      %v1066 = vpop.f32.mrf.mxu0
      %v1067 = vadd.f32 0.0, %v1066
      %1068 = vmatmul.f32.gmra.mxu0 %v957
      %v1069 = vpop.f32.mrf.mxu0
      %v1070 = vadd.f32 0.0, %v1069
      %1071 = vmatmul.f32.gmra.mxu0 %v960
      %v1072 = vpop.f32.mrf.mxu0
      %v1073 = vadd.f32 0.0, %v1072
      %1074 = vmatmul.f32.gmra.mxu0 %v963
      %v1075 = vpop.f32.mrf.mxu0
      %v1076 = vadd.f32 0.0, %v1075
      %1077 = vmatmul.f32.gmra.mxu0 %v966
      %v1078 = vpop.f32.mrf.mxu0
      %v1079 = vadd.f32 0.0, %v1078
      %1080 = vmatmul.f32.gmra.mxu0 %v969
      %v1081 = vpop.f32.mrf.mxu0
      %v1082 = vadd.f32 0.0, %v1081
      %1083 = vmatmul.f32.gmra.mxu0 %v972
      %v1084 = vpop.f32.mrf.mxu0
      %v1085 = vadd.f32 0.0, %v1084
      %1086 = vmatmul.f32.gmra.mxu0 %v975
      %v1087 = vpop.f32.mrf.mxu0
      %v1088 = vadd.f32 0.0, %v1087
      %1089 = vmatmul.f32.gmra.mxu0 %v978
      %v1090 = vpop.f32.mrf.mxu0
      %v1091 = vadd.f32 0.0, %v1090
      %1092 = vmatmul.f32.gmra.mxu0 %v981
      %v1093 = vpop.f32.mrf.mxu0
      %v1094 = vadd.f32 0.0, %v1093
      %1095 = vmatmul.f32.gmra.mxu0 %v984
      %v1096 = vpop.f32.mrf.mxu0
      %v1097 = vadd.f32 0.0, %v1096
      %1098 = vmatmul.f32.gmra.mxu0 %v987
      %v1099 = vpop.f32.mrf.mxu0
      %v1100 = vadd.f32 0.0, %v1099
      %1101 = vmatmul.f32.gmra.mxu0 %v990
      %v1102 = vpop.f32.mrf.mxu0
      %v1103 = vadd.f32 0.0, %v1102
      %1104 = vmatmul.f32.gmra.mxu0 %v993
      %v1105 = vpop.f32.mrf.mxu0
      %v1106 = vadd.f32 0.0, %v1105
      %1107 = vmatmul.f32.gmra.mxu0 %v996
      %v1108 = vpop.f32.mrf.mxu0
      %v1109 = vadd.f32 0.0, %v1108
      %1110 = vmatmul.f32.gmra.mxu0 %v999
      %v1111 = vpop.f32.mrf.mxu0
      %v1112 = vadd.f32 0.0, %v1111
      %1113 = vmatmul.f32.gmra.mxu0 %v1002
      %v1114 = vpop.f32.mrf.mxu0
      %v1115 = vadd.f32 0.0, %v1114
      %1116 = vmatmul.f32.gmra.mxu0 %v1005
      %v1117 = vpop.f32.mrf.mxu0
      %v1118 = vadd.f32 0.0, %v1117
      %1119 = vmatmul.f32.gmra.mxu0 %v1008
      %v1120 = vpop.f32.mrf.mxu0
      %v1121 = vadd.f32 0.0, %v1120
      %1122 = vmatmul.f32.gmra.mxu0 %v1011
      %v1123 = vpop.f32.mrf.mxu0
      %v1124 = vadd.f32 0.0, %v1123
      %1125 = vdwg.mxu0
      %v1127 = vsel %vm916, %v884, 0
      %v1130 = vsel %vm916, %v885, 0
      %v1133 = vsel %vm916, %v886, 0
      %v1136 = vsel %vm916, %v887, 0
      %v1139 = vsel %vm916, %v888, 0
      %v1142 = vsel %vm916, %v889, 0
      %v1145 = vsel %vm916, %v890, 0
      %v1148 = vsel %vm916, %v891, 0
      %v1151 = vsel %vm916, %v892, 0
      %v1154 = vsel %vm916, %v893, 0
      %v1157 = vsel %vm916, %v894, 0
      %v1160 = vsel %vm916, %v895, 0
      %v1163 = vsel %vm916, %v896, 0
      %v1166 = vsel %vm916, %v897, 0
      %v1169 = vsel %vm916, %v898, 0
      %v1172 = vsel %vm916, %v899, 0
      %v1175 = vsel %vm916, %v900, 0
      %v1178 = vsel %vm916, %v901, 0
      %v1181 = vsel %vm916, %v902, 0
      %v1184 = vsel %vm916, %v903, 0
      %v1187 = vsel %vm916, %v904, 0
      %v1190 = vsel %vm916, %v905, 0
      %v1193 = vsel %vm916, %v906, 0
      %v1196 = vsel %vm916, %v907, 0
      %v1199 = vsel %vm916, %v908, 0
      %v1202 = vsel %vm916, %v909, 0
      %v1205 = vsel %vm916, %v910, 0
      %v1208 = vsel %vm916, %v911, 0
      %v1211 = vsel %vm916, %v912, 0
      %v1214 = vsel %vm916, %v913, 0
      %v1217 = vsel %vm916, %v914, 0
      %v1220 = vsel %vm916, %v915, 0
      %1222 = vmatpush.msra.mxu0 0.0
      %1223 = vmatpush.msra.mxu0 0.0
      %1224 = vmatpush.msra.mxu0 0.0
      %1225 = vmatpush.msra.mxu0 0.0
      %1226 = vmatpush.msra.mxu0 0.0
      %1227 = vmatpush.msra.mxu0 0.0
      %1228 = vmatpush.msra.mxu0 0.0
      %1229 = vmatpush.msra.mxu0 0.0
      %1230 = vmatpush.msra.mxu0 0.0
      %1231 = vmatpush.msra.mxu0 0.0
      %1232 = vmatpush.msra.mxu0 0.0
      %1233 = vmatpush.msra.mxu0 0.0
      %1234 = vmatpush.msra.mxu0 %v465
      %1235 = vmatpush.msra.mxu0 %v464
      %1236 = vmatpush.msra.mxu0 %v463
      %1237 = vmatpush.msra.mxu0 %v462
      %1238 = vmatmul.f32.gmra.mxu0 %v1127
      %v1239 = vpop.f32.mrf.mxu0
      %v1240 = vadd.f32 0.0, %v1239
      %1241 = vmatmul.f32.gmra.mxu0 %v1130
      %v1242 = vpop.f32.mrf.mxu0
      %v1243 = vadd.f32 0.0, %v1242
      %1244 = vmatmul.f32.gmra.mxu0 %v1133
      %v1245 = vpop.f32.mrf.mxu0
      %v1246 = vadd.f32 0.0, %v1245
      %1247 = vmatmul.f32.gmra.mxu0 %v1136
      %v1248 = vpop.f32.mrf.mxu0
      %v1249 = vadd.f32 0.0, %v1248
      %1250 = vmatmul.f32.gmra.mxu0 %v1139
      %v1251 = vpop.f32.mrf.mxu0
      %v1252 = vadd.f32 0.0, %v1251
      %1253 = vmatmul.f32.gmra.mxu0 %v1142
      %v1254 = vpop.f32.mrf.mxu0
      %v1255 = vadd.f32 0.0, %v1254
      %1256 = vmatmul.f32.gmra.mxu0 %v1145
      %v1257 = vpop.f32.mrf.mxu0
      %v1258 = vadd.f32 0.0, %v1257
      %1259 = vmatmul.f32.gmra.mxu0 %v1148
      %v1260 = vpop.f32.mrf.mxu0
      %v1261 = vadd.f32 0.0, %v1260
      %1262 = vmatmul.f32.gmra.mxu0 %v1151
      %v1263 = vpop.f32.mrf.mxu0
      %v1264 = vadd.f32 0.0, %v1263
      %1265 = vmatmul.f32.gmra.mxu0 %v1154
      %v1266 = vpop.f32.mrf.mxu0
      %v1267 = vadd.f32 0.0, %v1266
      %1268 = vmatmul.f32.gmra.mxu0 %v1157
      %v1269 = vpop.f32.mrf.mxu0
      %v1270 = vadd.f32 0.0, %v1269
      %1271 = vmatmul.f32.gmra.mxu0 %v1160
      %v1272 = vpop.f32.mrf.mxu0
      %v1273 = vadd.f32 0.0, %v1272
      %1274 = vmatmul.f32.gmra.mxu0 %v1163
      %v1275 = vpop.f32.mrf.mxu0
      %v1276 = vadd.f32 0.0, %v1275
      %1277 = vmatmul.f32.gmra.mxu0 %v1166
      %v1278 = vpop.f32.mrf.mxu0
      %v1279 = vadd.f32 0.0, %v1278
      %1280 = vmatmul.f32.gmra.mxu0 %v1169
      %v1281 = vpop.f32.mrf.mxu0
      %v1282 = vadd.f32 0.0, %v1281
      %1283 = vmatmul.f32.gmra.mxu0 %v1172
      %v1284 = vpop.f32.mrf.mxu0
      %v1285 = vadd.f32 0.0, %v1284
      %1286 = vmatmul.f32.gmra.mxu0 %v1175
      %v1287 = vpop.f32.mrf.mxu0
      %v1288 = vadd.f32 0.0, %v1287
      %1289 = vmatmul.f32.gmra.mxu0 %v1178
      %v1290 = vpop.f32.mrf.mxu0
      %v1291 = vadd.f32 0.0, %v1290
      %1292 = vmatmul.f32.gmra.mxu0 %v1181
      %v1293 = vpop.f32.mrf.mxu0
      %v1294 = vadd.f32 0.0, %v1293
      %1295 = vmatmul.f32.gmra.mxu0 %v1184
      %v1296 = vpop.f32.mrf.mxu0
      %v1297 = vadd.f32 0.0, %v1296
      %1298 = vmatmul.f32.gmra.mxu0 %v1187
      %v1299 = vpop.f32.mrf.mxu0
      %v1300 = vadd.f32 0.0, %v1299
      %1301 = vmatmul.f32.gmra.mxu0 %v1190
      %v1302 = vpop.f32.mrf.mxu0
      %v1303 = vadd.f32 0.0, %v1302
      %1304 = vmatmul.f32.gmra.mxu0 %v1193
      %v1305 = vpop.f32.mrf.mxu0
      %v1306 = vadd.f32 0.0, %v1305
      %1307 = vmatmul.f32.gmra.mxu0 %v1196
      %v1308 = vpop.f32.mrf.mxu0
      %v1309 = vadd.f32 0.0, %v1308
      %1310 = vmatmul.f32.gmra.mxu0 %v1199
      %v1311 = vpop.f32.mrf.mxu0
      %v1312 = vadd.f32 0.0, %v1311
      %1313 = vmatmul.f32.gmra.mxu0 %v1202
      %v1314 = vpop.f32.mrf.mxu0
      %v1315 = vadd.f32 0.0, %v1314
      %1316 = vmatmul.f32.gmra.mxu0 %v1205
      %v1317 = vpop.f32.mrf.mxu0
      %v1318 = vadd.f32 0.0, %v1317
      %1319 = vmatmul.f32.gmra.mxu0 %v1208
      %v1320 = vpop.f32.mrf.mxu0
      %v1321 = vadd.f32 0.0, %v1320
      %1322 = vmatmul.f32.gmra.mxu0 %v1211
      %v1323 = vpop.f32.mrf.mxu0
      %v1324 = vadd.f32 0.0, %v1323
      %1325 = vmatmul.f32.gmra.mxu0 %v1214
      %v1326 = vpop.f32.mrf.mxu0
      %v1327 = vadd.f32 0.0, %v1326
      %1328 = vmatmul.f32.gmra.mxu0 %v1217
      %v1329 = vpop.f32.mrf.mxu0
      %v1330 = vadd.f32 0.0, %v1329
      %1331 = vmatmul.f32.gmra.mxu0 %v1220
      %v1332 = vpop.f32.mrf.mxu0
      %v1333 = vadd.f32 0.0, %v1332
      %1334 = vdwg.mxu0
      %v1335 = vpack.c.bf16 %v1034, %v1031
      %v1336 = vpack.c.bf16 %v1040, %v1037
      %v1337 = vpack.c.bf16 %v1046, %v1043
      %v1338 = vpack.c.bf16 %v1052, %v1049
      %v1339 = vpack.c.bf16 %v1058, %v1055
      %v1340 = vpack.c.bf16 %v1064, %v1061
      %v1341 = vpack.c.bf16 %v1070, %v1067
      %v1342 = vpack.c.bf16 %v1076, %v1073
      %v1343 = vpack.c.bf16 %v1082, %v1079
      %v1344 = vpack.c.bf16 %v1088, %v1085
      %v1345 = vpack.c.bf16 %v1094, %v1091
      %v1346 = vpack.c.bf16 %v1100, %v1097
      %v1347 = vpack.c.bf16 %v1106, %v1103
      %v1348 = vpack.c.bf16 %v1112, %v1109
      %v1349 = vpack.c.bf16 %v1118, %v1115
      %v1350 = vpack.c.bf16 %v1124, %v1121
      %v1351 = vld [vmem:[%s3] sm:$0xf]
      %v1352 = vld [vmem:[%s3 + $0x4] sm:$0xf]
      %v1353 = vpack.c.bf16 %v1243, %v1240
      %v1354 = vpack.c.bf16 %v1249, %v1246
      %v1355 = vpack.c.bf16 %v1255, %v1252
      %v1356 = vpack.c.bf16 %v1261, %v1258
      %v1357 = vpack.c.bf16 %v1267, %v1264
      %v1358 = vpack.c.bf16 %v1273, %v1270
      %v1359 = vpack.c.bf16 %v1279, %v1276
      %v1360 = vpack.c.bf16 %v1285, %v1282
      %v1361 = vpack.c.bf16 %v1291, %v1288
      %v1362 = vpack.c.bf16 %v1297, %v1294
      %v1363 = vpack.c.bf16 %v1303, %v1300
      %v1364 = vpack.c.bf16 %v1309, %v1306
      %v1365 = vpack.c.bf16 %v1315, %v1312
      %v1366 = vpack.c.bf16 %v1321, %v1318
      %v1367 = vpack.c.bf16 %v1327, %v1324
      %v1368 = vpack.c.bf16 %v1333, %v1330
      %v1369 = vld [vmem:[%s4] sm:$0xf]
      %v1370 = vld [vmem:[%s4 + $0x4] sm:$0xf]
      %v1373 = vunpack.c.l.b16 %v1369
      %v1374 = vunpack.c.l.b16 %v1370
      %v1375 = vpack.c.b16 %v1374, %v1373
      %vm1377 = vcmask 130048
      %v1379 = vsel %vm1377, %v1353, 0
      %v1382 = vsel %vm1377, %v1354, 0
      %v1385 = vsel %vm1377, %v1355, 0
      %v1388 = vsel %vm1377, %v1356, 0
      %v1391 = vsel %vm1377, %v1357, 0
      %v1394 = vsel %vm1377, %v1358, 0
      %v1397 = vsel %vm1377, %v1359, 0
      %v1400 = vsel %vm1377, %v1360, 0
      %v1403 = vsel %vm1377, %v1361, 0
      %v1406 = vsel %vm1377, %v1362, 0
      %v1409 = vsel %vm1377, %v1363, 0
      %v1412 = vsel %vm1377, %v1364, 0
      %v1415 = vsel %vm1377, %v1365, 0
      %v1418 = vsel %vm1377, %v1366, 0
      %v1421 = vsel %vm1377, %v1367, 0
      %v1424 = vsel %vm1377, %v1368, 0
      %1426 = vmatpush.bf16.msra.mxu0 0
      %1427 = vmatpush.bf16.msra.mxu0 0
      %1428 = vmatpush.bf16.msra.mxu0 0
      %1429 = vmatpush.bf16.msra.mxu0 0
      %1430 = vmatpush.bf16.msra.mxu0 0
      %1431 = vmatpush.bf16.msra.mxu0 0
      %1432 = vmatpush.bf16.msra.mxu0 0
      %1433 = vmatpush.bf16.msra.mxu0 %v1375
      %1434 = vmatmul.bf16.gmra.mxu0 %v1379
      %v1435 = vpop.f32.mrf.mxu0
      %v1436 = vadd.f32 0.0, %v1435
      %v1437 = vpop.f32.mrf.mxu0
      %v1438 = vadd.f32 0.0, %v1437
      %1439 = vmatmul.bf16.gmra.mxu0 %v1382
      %v1440 = vpop.f32.mrf.mxu0
      %v1441 = vadd.f32 0.0, %v1440
      %v1442 = vpop.f32.mrf.mxu0
      %v1443 = vadd.f32 0.0, %v1442
      %1444 = vmatmul.bf16.gmra.mxu0 %v1385
      %v1445 = vpop.f32.mrf.mxu0
      %v1446 = vadd.f32 0.0, %v1445
      %v1447 = vpop.f32.mrf.mxu0
      %v1448 = vadd.f32 0.0, %v1447
      %1449 = vmatmul.bf16.gmra.mxu0 %v1388
      %v1450 = vpop.f32.mrf.mxu0
      %v1451 = vadd.f32 0.0, %v1450
      %v1452 = vpop.f32.mrf.mxu0
      %v1453 = vadd.f32 0.0, %v1452
      %1454 = vmatmul.bf16.gmra.mxu0 %v1391
      %v1455 = vpop.f32.mrf.mxu0
      %v1456 = vadd.f32 0.0, %v1455
      %v1457 = vpop.f32.mrf.mxu0
      %v1458 = vadd.f32 0.0, %v1457
      %1459 = vmatmul.bf16.gmra.mxu0 %v1394
      %v1460 = vpop.f32.mrf.mxu0
      %v1461 = vadd.f32 0.0, %v1460
      %v1462 = vpop.f32.mrf.mxu0
      %v1463 = vadd.f32 0.0, %v1462
      %1464 = vmatmul.bf16.gmra.mxu0 %v1397
      %v1465 = vpop.f32.mrf.mxu0
      %v1466 = vadd.f32 0.0, %v1465
      %v1467 = vpop.f32.mrf.mxu0
      %v1468 = vadd.f32 0.0, %v1467
      %1469 = vmatmul.bf16.gmra.mxu0 %v1400
      %v1470 = vpop.f32.mrf.mxu0
      %v1471 = vadd.f32 0.0, %v1470
      %v1472 = vpop.f32.mrf.mxu0
      %v1473 = vadd.f32 0.0, %v1472
      %1474 = vmatmul.bf16.gmra.mxu0 %v1403
      %v1475 = vpop.f32.mrf.mxu0
      %v1476 = vadd.f32 0.0, %v1475
      %v1477 = vpop.f32.mrf.mxu0
      %v1478 = vadd.f32 0.0, %v1477
      %1479 = vmatmul.bf16.gmra.mxu0 %v1406
      %v1480 = vpop.f32.mrf.mxu0
      %v1481 = vadd.f32 0.0, %v1480
      %v1482 = vpop.f32.mrf.mxu0
      %v1483 = vadd.f32 0.0, %v1482
      %1484 = vmatmul.bf16.gmra.mxu0 %v1409
      %v1485 = vpop.f32.mrf.mxu0
      %v1486 = vadd.f32 0.0, %v1485
      %v1487 = vpop.f32.mrf.mxu0
      %v1488 = vadd.f32 0.0, %v1487
      %1489 = vmatmul.bf16.gmra.mxu0 %v1412
      %v1490 = vpop.f32.mrf.mxu0
      %v1491 = vadd.f32 0.0, %v1490
      %v1492 = vpop.f32.mrf.mxu0
      %v1493 = vadd.f32 0.0, %v1492
      %1494 = vmatmul.bf16.gmra.mxu0 %v1415
      %v1495 = vpop.f32.mrf.mxu0
      %v1496 = vadd.f32 0.0, %v1495
      %v1497 = vpop.f32.mrf.mxu0
      %v1498 = vadd.f32 0.0, %v1497
      %1499 = vmatmul.bf16.gmra.mxu0 %v1418
      %v1500 = vpop.f32.mrf.mxu0
      %v1501 = vadd.f32 0.0, %v1500
      %v1502 = vpop.f32.mrf.mxu0
      %v1503 = vadd.f32 0.0, %v1502
      %1504 = vmatmul.bf16.gmra.mxu0 %v1421
      %v1505 = vpop.f32.mrf.mxu0
      %v1506 = vadd.f32 0.0, %v1505
      %v1507 = vpop.f32.mrf.mxu0
      %v1508 = vadd.f32 0.0, %v1507
      %1509 = vmatmul.bf16.gmra.mxu0 %v1424
      %v1510 = vpop.f32.mrf.mxu0
      %v1511 = vadd.f32 0.0, %v1510
      %v1512 = vpop.f32.mrf.mxu0
      %v1513 = vadd.f32 0.0, %v1512
      %1514 = vdwg.mxu0
      %v1517 = vunpack.c.l.b16 %v1351
      %v1518 = vunpack.c.l.b16 %v1352
      %v1519 = vpack.c.b16 %v1518, %v1517
      %v1522 = vsel %vm1377, %v1335, 0
      %v1525 = vsel %vm1377, %v1336, 0
      %v1528 = vsel %vm1377, %v1337, 0
      %v1531 = vsel %vm1377, %v1338, 0
      %v1534 = vsel %vm1377, %v1339, 0
      %v1537 = vsel %vm1377, %v1340, 0
      %v1540 = vsel %vm1377, %v1341, 0
      %v1543 = vsel %vm1377, %v1342, 0
      %v1546 = vsel %vm1377, %v1343, 0
      %v1549 = vsel %vm1377, %v1344, 0
      %v1552 = vsel %vm1377, %v1345, 0
      %v1555 = vsel %vm1377, %v1346, 0
      %v1558 = vsel %vm1377, %v1347, 0
      %v1561 = vsel %vm1377, %v1348, 0
      %v1564 = vsel %vm1377, %v1349, 0
      %v1567 = vsel %vm1377, %v1350, 0
      %1569 = vmatpush.bf16.msra.mxu0 0
      %1570 = vmatpush.bf16.msra.mxu0 0
      %1571 = vmatpush.bf16.msra.mxu0 0
      %1572 = vmatpush.bf16.msra.mxu0 0
      %1573 = vmatpush.bf16.msra.mxu0 0
      %1574 = vmatpush.bf16.msra.mxu0 0
      %1575 = vmatpush.bf16.msra.mxu0 0
      %1576 = vmatpush.bf16.msra.mxu0 %v1519
      %1577 = vmatmul.bf16.gmra.mxu0 %v1522
      %v1578 = vpop.f32.mrf.mxu0
      %v1579 = vadd.f32 %v1436, %v1578
      %v1580 = vpop.f32.mrf.mxu0
      %v1581 = vadd.f32 %v1438, %v1580
      %1582 = vmatmul.bf16.gmra.mxu0 %v1525
      %v1583 = vpop.f32.mrf.mxu0
      %v1584 = vadd.f32 %v1441, %v1583
      %v1585 = vpop.f32.mrf.mxu0
      %v1586 = vadd.f32 %v1443, %v1585
      %1587 = vmatmul.bf16.gmra.mxu0 %v1528
      %v1588 = vpop.f32.mrf.mxu0
      %v1589 = vadd.f32 %v1446, %v1588
      %v1590 = vpop.f32.mrf.mxu0
      %v1591 = vadd.f32 %v1448, %v1590
      %1592 = vmatmul.bf16.gmra.mxu0 %v1531
      %v1593 = vpop.f32.mrf.mxu0
      %v1594 = vadd.f32 %v1451, %v1593
      %v1595 = vpop.f32.mrf.mxu0
      %v1596 = vadd.f32 %v1453, %v1595
      %1597 = vmatmul.bf16.gmra.mxu0 %v1534
      %v1598 = vpop.f32.mrf.mxu0
      %v1599 = vadd.f32 %v1456, %v1598
      %v1600 = vpop.f32.mrf.mxu0
      %v1601 = vadd.f32 %v1458, %v1600
      %1602 = vmatmul.bf16.gmra.mxu0 %v1537
      %v1603 = vpop.f32.mrf.mxu0
      %v1604 = vadd.f32 %v1461, %v1603
      %v1605 = vpop.f32.mrf.mxu0
      %v1606 = vadd.f32 %v1463, %v1605
      %1607 = vmatmul.bf16.gmra.mxu0 %v1540
      %v1608 = vpop.f32.mrf.mxu0
      %v1609 = vadd.f32 %v1466, %v1608
      %v1610 = vpop.f32.mrf.mxu0
      %v1611 = vadd.f32 %v1468, %v1610
      %1612 = vmatmul.bf16.gmra.mxu0 %v1543
      %v1613 = vpop.f32.mrf.mxu0
      %v1614 = vadd.f32 %v1471, %v1613
      %v1615 = vpop.f32.mrf.mxu0
      %v1616 = vadd.f32 %v1473, %v1615
      %1617 = vmatmul.bf16.gmra.mxu0 %v1546
      %v1618 = vpop.f32.mrf.mxu0
      %v1619 = vadd.f32 %v1476, %v1618
      %v1620 = vpop.f32.mrf.mxu0
      %v1621 = vadd.f32 %v1478, %v1620
      %1622 = vmatmul.bf16.gmra.mxu0 %v1549
      %v1623 = vpop.f32.mrf.mxu0
      %v1624 = vadd.f32 %v1481, %v1623
      %v1625 = vpop.f32.mrf.mxu0
      %v1626 = vadd.f32 %v1483, %v1625
      %1627 = vmatmul.bf16.gmra.mxu0 %v1552
      %v1628 = vpop.f32.mrf.mxu0
      %v1629 = vadd.f32 %v1486, %v1628
      %v1630 = vpop.f32.mrf.mxu0
      %v1631 = vadd.f32 %v1488, %v1630
      %1632 = vmatmul.bf16.gmra.mxu0 %v1555
      %v1633 = vpop.f32.mrf.mxu0
      %v1634 = vadd.f32 %v1491, %v1633
      %v1635 = vpop.f32.mrf.mxu0
      %v1636 = vadd.f32 %v1493, %v1635
      %1637 = vmatmul.bf16.gmra.mxu0 %v1558
      %v1638 = vpop.f32.mrf.mxu0
      %v1639 = vadd.f32 %v1496, %v1638
      %v1640 = vpop.f32.mrf.mxu0
      %v1641 = vadd.f32 %v1498, %v1640
      %1642 = vmatmul.bf16.gmra.mxu0 %v1561
      %v1643 = vpop.f32.mrf.mxu0
      %v1644 = vadd.f32 %v1501, %v1643
      %v1645 = vpop.f32.mrf.mxu0
      %v1646 = vadd.f32 %v1503, %v1645
      %1647 = vmatmul.bf16.gmra.mxu0 %v1564
      %v1648 = vpop.f32.mrf.mxu0
      %v1649 = vadd.f32 %v1506, %v1648
      %v1650 = vpop.f32.mrf.mxu0
      %v1651 = vadd.f32 %v1508, %v1650
      %1652 = vmatmul.bf16.gmra.mxu0 %v1567
      %v1653 = vpop.f32.mrf.mxu0
      %v1654 = vadd.f32 %v1511, %v1653
      %v1655 = vpop.f32.mrf.mxu0
      %v1656 = vadd.f32 %v1513, %v1655
      %1657 = vdwg.mxu0
      %v1658 = vld [vmem:[%s5] sm:$0x1]
      %v1660 = vperm.slane %v1658, 0
      %v1662 = vadd.f32 %v1579, %v1660
      %v1663 = vadd.f32 %v1581, %v1660
      %v1664 = vadd.f32 %v1584, %v1660
      %v1665 = vadd.f32 %v1586, %v1660
      %v1666 = vadd.f32 %v1589, %v1660
      %v1667 = vadd.f32 %v1591, %v1660
      %v1668 = vadd.f32 %v1594, %v1660
      %v1669 = vadd.f32 %v1596, %v1660
      %v1670 = vadd.f32 %v1599, %v1660
      %v1671 = vadd.f32 %v1601, %v1660
      %v1672 = vadd.f32 %v1604, %v1660
      %v1673 = vadd.f32 %v1606, %v1660
      %v1674 = vadd.f32 %v1609, %v1660
      %v1675 = vadd.f32 %v1611, %v1660
      %v1676 = vadd.f32 %v1614, %v1660
      %v1677 = vadd.f32 %v1616, %v1660
      %v1678 = vadd.f32 %v1619, %v1660
      %v1679 = vadd.f32 %v1621, %v1660
      %v1680 = vadd.f32 %v1624, %v1660
      %v1681 = vadd.f32 %v1626, %v1660
      %v1682 = vadd.f32 %v1629, %v1660
      %v1683 = vadd.f32 %v1631, %v1660
      %v1684 = vadd.f32 %v1634, %v1660
      %v1685 = vadd.f32 %v1636, %v1660
      %v1686 = vadd.f32 %v1639, %v1660
      %v1687 = vadd.f32 %v1641, %v1660
      %v1688 = vadd.f32 %v1644, %v1660
      %v1689 = vadd.f32 %v1646, %v1660
      %v1690 = vadd.f32 %v1649, %v1660
      %v1691 = vadd.f32 %v1651, %v1660
      %v1692 = vadd.f32 %v1654, %v1660
      %v1693 = vadd.f32 %v1656, %v1660
      %v1694 = vmax.f32 %v1662, 0.0
      %v1695 = vmax.f32 %v1663, 0.0
      %v1696 = vmax.f32 %v1664, 0.0
      %v1697 = vmax.f32 %v1665, 0.0
      %v1698 = vmax.f32 %v1666, 0.0
      %v1699 = vmax.f32 %v1667, 0.0
      %v1700 = vmax.f32 %v1668, 0.0
      %v1701 = vmax.f32 %v1669, 0.0
      %v1702 = vmax.f32 %v1670, 0.0
      %v1703 = vmax.f32 %v1671, 0.0
      %v1704 = vmax.f32 %v1672, 0.0
      %v1705 = vmax.f32 %v1673, 0.0
      %v1706 = vmax.f32 %v1674, 0.0
      %v1707 = vmax.f32 %v1675, 0.0
      %v1708 = vmax.f32 %v1676, 0.0
      %v1709 = vmax.f32 %v1677, 0.0
      %v1710 = vmax.f32 %v1678, 0.0
      %v1711 = vmax.f32 %v1679, 0.0
      %v1712 = vmax.f32 %v1680, 0.0
      %v1713 = vmax.f32 %v1681, 0.0
      %v1714 = vmax.f32 %v1682, 0.0
      %v1715 = vmax.f32 %v1683, 0.0
      %v1716 = vmax.f32 %v1684, 0.0
      %v1717 = vmax.f32 %v1685, 0.0
      %v1718 = vmax.f32 %v1686, 0.0
      %v1719 = vmax.f32 %v1687, 0.0
      %v1720 = vmax.f32 %v1688, 0.0
      %v1721 = vmax.f32 %v1689, 0.0
      %v1722 = vmax.f32 %v1690, 0.0
      %v1723 = vmax.f32 %v1691, 0.0
      %v1724 = vmax.f32 %v1692, 0.0
      %v1725 = vmax.f32 %v1693, 0.0
      %v1726 = vld [vmem:[%s6] sm:$0x1]
      %v1728 = vperm.slane %v1726, 0
      %v1730 = vmul.f32 %v1694, %v1728
      %v1731 = vmul.f32 %v1695, %v1728
      %v1732 = vmul.f32 %v1696, %v1728
      %v1733 = vmul.f32 %v1697, %v1728
      %v1734 = vmul.f32 %v1698, %v1728
      %v1735 = vmul.f32 %v1699, %v1728
      %v1736 = vmul.f32 %v1700, %v1728
      %v1737 = vmul.f32 %v1701, %v1728
      %v1738 = vmul.f32 %v1702, %v1728
      %v1739 = vmul.f32 %v1703, %v1728
      %v1740 = vmul.f32 %v1704, %v1728
      %v1741 = vmul.f32 %v1705, %v1728
      %v1742 = vmul.f32 %v1706, %v1728
      %v1743 = vmul.f32 %v1707, %v1728
      %v1744 = vmul.f32 %v1708, %v1728
      %v1745 = vmul.f32 %v1709, %v1728
      %v1746 = vmul.f32 %v1710, %v1728
      %v1747 = vmul.f32 %v1711, %v1728
      %v1748 = vmul.f32 %v1712, %v1728
      %v1749 = vmul.f32 %v1713, %v1728
      %v1750 = vmul.f32 %v1714, %v1728
      %v1751 = vmul.f32 %v1715, %v1728
      %v1752 = vmul.f32 %v1716, %v1728
      %v1753 = vmul.f32 %v1717, %v1728
      %v1754 = vmul.f32 %v1718, %v1728
      %v1755 = vmul.f32 %v1719, %v1728
      %v1756 = vmul.f32 %v1720, %v1728
      %v1757 = vmul.f32 %v1721, %v1728
      %v1758 = vmul.f32 %v1722, %v1728
      %v1759 = vmul.f32 %v1723, %v1728
      %v1760 = vmul.f32 %v1724, %v1728
      %v1761 = vmul.f32 %v1725, %v1728
      %1762 = vadd.xlane.f32.xlu0 %v1730
      %v1763 = vpop.xlane.xlu0 %1762
      %1764 = vadd.xlane.f32.xlu0 %v1731
      %v1765 = vpop.xlane.xlu0 %1764
      %1766 = vadd.xlane.f32.xlu0 %v1732
      %v1767 = vpop.xlane.xlu0 %1766
      %1768 = vadd.xlane.f32.xlu0 %v1733
      %v1769 = vpop.xlane.xlu0 %1768
      %1770 = vadd.xlane.f32.xlu0 %v1734
      %v1771 = vpop.xlane.xlu0 %1770
      %1772 = vadd.xlane.f32.xlu0 %v1735
      %v1773 = vpop.xlane.xlu0 %1772
      %1774 = vadd.xlane.f32.xlu0 %v1736
      %v1775 = vpop.xlane.xlu0 %1774
      %1776 = vadd.xlane.f32.xlu0 %v1737
      %v1777 = vpop.xlane.xlu0 %1776
      %1778 = vadd.xlane.f32.xlu0 %v1738
      %v1779 = vpop.xlane.xlu0 %1778
      %1780 = vadd.xlane.f32.xlu0 %v1739
      %v1781 = vpop.xlane.xlu0 %1780
      %1782 = vadd.xlane.f32.xlu0 %v1740
      %v1783 = vpop.xlane.xlu0 %1782
      %1784 = vadd.xlane.f32.xlu0 %v1741
      %v1785 = vpop.xlane.xlu0 %1784
      %1786 = vadd.xlane.f32.xlu0 %v1742
      %v1787 = vpop.xlane.xlu0 %1786
      %1788 = vadd.xlane.f32.xlu0 %v1743
      %v1789 = vpop.xlane.xlu0 %1788
      %1790 = vadd.xlane.f32.xlu0 %v1744
      %v1791 = vpop.xlane.xlu0 %1790
      %1792 = vadd.xlane.f32.xlu0 %v1745
      %v1793 = vpop.xlane.xlu0 %1792
      %1794 = vadd.xlane.f32.xlu0 %v1746
      %v1795 = vpop.xlane.xlu0 %1794
      %1796 = vadd.xlane.f32.xlu0 %v1747
      %v1797 = vpop.xlane.xlu0 %1796
      %1798 = vadd.xlane.f32.xlu0 %v1748
      %v1799 = vpop.xlane.xlu0 %1798
      %1800 = vadd.xlane.f32.xlu0 %v1749
      %v1801 = vpop.xlane.xlu0 %1800
      %1802 = vadd.xlane.f32.xlu0 %v1750
      %v1803 = vpop.xlane.xlu0 %1802
      %1804 = vadd.xlane.f32.xlu0 %v1751
      %v1805 = vpop.xlane.xlu0 %1804
      %1806 = vadd.xlane.f32.xlu0 %v1752
      %v1807 = vpop.xlane.xlu0 %1806
      %1808 = vadd.xlane.f32.xlu0 %v1753
      %v1809 = vpop.xlane.xlu0 %1808
      %1810 = vadd.xlane.f32.xlu0 %v1754
      %v1811 = vpop.xlane.xlu0 %1810
      %1812 = vadd.xlane.f32.xlu0 %v1755
      %v1813 = vpop.xlane.xlu0 %1812
      %1814 = vadd.xlane.f32.xlu0 %v1756
      %v1815 = vpop.xlane.xlu0 %1814
      %1816 = vadd.xlane.f32.xlu0 %v1757
      %v1817 = vpop.xlane.xlu0 %1816
      %1818 = vadd.xlane.f32.xlu0 %v1758
      %v1819 = vpop.xlane.xlu0 %1818
      %1820 = vadd.xlane.f32.xlu0 %v1759
      %v1821 = vpop.xlane.xlu0 %1820
      %1822 = vadd.xlane.f32.xlu0 %v1760
      %v1823 = vpop.xlane.xlu0 %1822
      %1824 = vadd.xlane.f32.xlu0 %v1761
      %v1825 = vpop.xlane.xlu0 %1824
      %v1826 = vld [vmem:[#allocation3] sm:$0x1]
      %v1828 = vperm.slane %v1826, 0
      %v1830 = vadd.f32 %v1763, %v1828
      %v1831 = vadd.f32 %v1765, %v1828
      %v1832 = vadd.f32 %v1767, %v1828
      %v1833 = vadd.f32 %v1769, %v1828
      %v1834 = vadd.f32 %v1771, %v1828
      %v1835 = vadd.f32 %v1773, %v1828
      %v1836 = vadd.f32 %v1775, %v1828
      %v1837 = vadd.f32 %v1777, %v1828
      %v1838 = vadd.f32 %v1779, %v1828
      %v1839 = vadd.f32 %v1781, %v1828
      %v1840 = vadd.f32 %v1783, %v1828
      %v1841 = vadd.f32 %v1785, %v1828
      %v1842 = vadd.f32 %v1787, %v1828
      %v1843 = vadd.f32 %v1789, %v1828
      %v1844 = vadd.f32 %v1791, %v1828
      %v1845 = vadd.f32 %v1793, %v1828
      %v1846 = vadd.f32 %v1795, %v1828
      %v1847 = vadd.f32 %v1797, %v1828
      %v1848 = vadd.f32 %v1799, %v1828
      %v1849 = vadd.f32 %v1801, %v1828
      %v1850 = vadd.f32 %v1803, %v1828
      %v1851 = vadd.f32 %v1805, %v1828
      %v1852 = vadd.f32 %v1807, %v1828
      %v1853 = vadd.f32 %v1809, %v1828
      %v1854 = vadd.f32 %v1811, %v1828
      %v1855 = vadd.f32 %v1813, %v1828
      %v1856 = vadd.f32 %v1815, %v1828
      %v1857 = vadd.f32 %v1817, %v1828
      %v1858 = vadd.f32 %v1819, %v1828
      %v1859 = vadd.f32 %v1821, %v1828
      %v1860 = vadd.f32 %v1823, %v1828
      %v1861 = vadd.f32 %v1825, %v1828
      %v1862 = vxor.u32 %v1830, 2147483648
      %v1863 = vxor.u32 %v1831, 2147483648
      %v1864 = vxor.u32 %v1832, 2147483648
      %v1865 = vxor.u32 %v1833, 2147483648
      %v1866 = vxor.u32 %v1834, 2147483648
      %v1867 = vxor.u32 %v1835, 2147483648
      %v1868 = vxor.u32 %v1836, 2147483648
      %v1869 = vxor.u32 %v1837, 2147483648
      %v1870 = vxor.u32 %v1838, 2147483648
      %v1871 = vxor.u32 %v1839, 2147483648
      %v1872 = vxor.u32 %v1840, 2147483648
      %v1873 = vxor.u32 %v1841, 2147483648
      %v1874 = vxor.u32 %v1842, 2147483648
      %v1875 = vxor.u32 %v1843, 2147483648
      %v1876 = vxor.u32 %v1844, 2147483648
      %v1877 = vxor.u32 %v1845, 2147483648
      %v1878 = vxor.u32 %v1846, 2147483648
      %v1879 = vxor.u32 %v1847, 2147483648
      %v1880 = vxor.u32 %v1848, 2147483648
      %v1881 = vxor.u32 %v1849, 2147483648
      %v1882 = vxor.u32 %v1850, 2147483648
      %v1883 = vxor.u32 %v1851, 2147483648
      %v1884 = vxor.u32 %v1852, 2147483648
      %v1885 = vxor.u32 %v1853, 2147483648
      %v1886 = vxor.u32 %v1854, 2147483648
      %v1887 = vxor.u32 %v1855, 2147483648
      %v1888 = vxor.u32 %v1856, 2147483648
      %v1889 = vxor.u32 %v1857, 2147483648
      %v1890 = vxor.u32 %v1858, 2147483648
      %v1891 = vxor.u32 %v1859, 2147483648
      %v1892 = vxor.u32 %v1860, 2147483648
      %v1893 = vxor.u32 %v1861, 2147483648
      %v1894 = vmul.f32 %v1862, 1.442695
      %v1895 = vpow.pop %v1894
      %v1896 = vmul.f32 %v1863, 1.442695
      %v1897 = vpow.pop %v1896
      %v1898 = vmul.f32 %v1864, 1.442695
      %v1899 = vpow.pop %v1898
      %v1900 = vmul.f32 %v1865, 1.442695
      %v1901 = vpow.pop %v1900
      %v1902 = vmul.f32 %v1866, 1.442695
      %v1903 = vpow.pop %v1902
      %v1904 = vmul.f32 %v1867, 1.442695
      %v1905 = vpow.pop %v1904
      %v1906 = vmul.f32 %v1868, 1.442695
      %v1907 = vpow.pop %v1906
      %v1908 = vmul.f32 %v1869, 1.442695
      %v1909 = vpow.pop %v1908
      %v1910 = vmul.f32 %v1870, 1.442695
      %v1911 = vpow.pop %v1910
      %v1912 = vmul.f32 %v1871, 1.442695
      %v1913 = vpow.pop %v1912
      %v1914 = vmul.f32 %v1872, 1.442695
      %v1915 = vpow.pop %v1914
      %v1916 = vmul.f32 %v1873, 1.442695
      %v1917 = vpow.pop %v1916
      %v1918 = vmul.f32 %v1874, 1.442695
      %v1919 = vpow.pop %v1918
      %v1920 = vmul.f32 %v1875, 1.442695
      %v1921 = vpow.pop %v1920
      %v1922 = vmul.f32 %v1876, 1.442695
      %v1923 = vpow.pop %v1922
      %v1924 = vmul.f32 %v1877, 1.442695
      %v1925 = vpow.pop %v1924
      %v1926 = vmul.f32 %v1878, 1.442695
      %v1927 = vpow.pop %v1926
      %v1928 = vmul.f32 %v1879, 1.442695
      %v1929 = vpow.pop %v1928
      %v1930 = vmul.f32 %v1880, 1.442695
      %v1931 = vpow.pop %v1930
      %v1932 = vmul.f32 %v1881, 1.442695
      %v1933 = vpow.pop %v1932
      %v1934 = vmul.f32 %v1882, 1.442695
      %v1935 = vpow.pop %v1934
      %v1936 = vmul.f32 %v1883, 1.442695
      %v1937 = vpow.pop %v1936
      %v1938 = vmul.f32 %v1884, 1.442695
      %v1939 = vpow.pop %v1938
      %v1940 = vmul.f32 %v1885, 1.442695
      %v1941 = vpow.pop %v1940
      %v1942 = vmul.f32 %v1886, 1.442695
      %v1943 = vpow.pop %v1942
      %v1944 = vmul.f32 %v1887, 1.442695
      %v1945 = vpow.pop %v1944
      %v1946 = vmul.f32 %v1888, 1.442695
      %v1947 = vpow.pop %v1946
      %v1948 = vmul.f32 %v1889, 1.442695
      %v1949 = vpow.pop %v1948
      %v1950 = vmul.f32 %v1890, 1.442695
      %v1951 = vpow.pop %v1950
      %v1952 = vmul.f32 %v1891, 1.442695
      %v1953 = vpow.pop %v1952
      %v1954 = vmul.f32 %v1892, 1.442695
      %v1955 = vpow.pop %v1954
      %v1956 = vmul.f32 %v1893, 1.442695
      %v1957 = vpow.pop %v1956
      %v1958 = vadd.f32 %v1895, 1.0
      %v1959 = vadd.f32 %v1897, 1.0
      %v1960 = vadd.f32 %v1899, 1.0
      %v1961 = vadd.f32 %v1901, 1.0
      %v1962 = vadd.f32 %v1903, 1.0
      %v1963 = vadd.f32 %v1905, 1.0
      %v1964 = vadd.f32 %v1907, 1.0
      %v1965 = vadd.f32 %v1909, 1.0
      %v1966 = vadd.f32 %v1911, 1.0
      %v1967 = vadd.f32 %v1913, 1.0
      %v1968 = vadd.f32 %v1915, 1.0
      %v1969 = vadd.f32 %v1917, 1.0
      %v1970 = vadd.f32 %v1919, 1.0
      %v1971 = vadd.f32 %v1921, 1.0
      %v1972 = vadd.f32 %v1923, 1.0
      %v1973 = vadd.f32 %v1925, 1.0
      %v1974 = vadd.f32 %v1927, 1.0
      %v1975 = vadd.f32 %v1929, 1.0
      %v1976 = vadd.f32 %v1931, 1.0
      %v1977 = vadd.f32 %v1933, 1.0
      %v1978 = vadd.f32 %v1935, 1.0
      %v1979 = vadd.f32 %v1937, 1.0
      %v1980 = vadd.f32 %v1939, 1.0
      %v1981 = vadd.f32 %v1941, 1.0
      %v1982 = vadd.f32 %v1943, 1.0
      %v1983 = vadd.f32 %v1945, 1.0
      %v1984 = vadd.f32 %v1947, 1.0
      %v1985 = vadd.f32 %v1949, 1.0
      %v1986 = vadd.f32 %v1951, 1.0
      %v1987 = vadd.f32 %v1953, 1.0
      %v1988 = vadd.f32 %v1955, 1.0
      %v1989 = vadd.f32 %v1957, 1.0
      %v1990 = vrcp.pop %v1958
      %v1991 = vmul.f32 %v1958, %v1990
      %v1992 = vsub.f32 1.0, %v1991
      %v1993 = vmul.f32 %v1990, %v1992
      %v1994 = vadd.f32 %v1990, %v1993
      %vm1995 = vweird.f32 %v1958
      %vm1996 = vweird.f32 %v1990
      %vm1997 = vmor %vm1995, %vm1996
      %v1998 = vsel %vm1997, %v1990, %v1994
      %v1999 = vand.u32 2147483647, %v1958
      %vm2000 = vcmp.eq.f32.partialorder %v1999, 8.507059e+37
      %v2001 = vand.u32 %v1958, 2147483648
      %v2002 = vor.u32 1.1754944e-38, %v2001
      %v2003 = vsel %vm2000, %v2002, %v1998
      %v2004 = vmul.f32 1.0, %v2003
      %v2005 = vrcp.pop %v1959
      %v2006 = vmul.f32 %v1959, %v2005
      %v2007 = vsub.f32 1.0, %v2006
      %v2008 = vmul.f32 %v2005, %v2007
      %v2009 = vadd.f32 %v2005, %v2008
      %vm2010 = vweird.f32 %v1959
      %vm2011 = vweird.f32 %v2005
      %vm2012 = vmor %vm2010, %vm2011
      %v2013 = vsel %vm2012, %v2005, %v2009
      %v2014 = vand.u32 2147483647, %v1959
      %vm2015 = vcmp.eq.f32.partialorder %v2014, 8.507059e+37
      %v2016 = vand.u32 %v1959, 2147483648
      %v2017 = vor.u32 1.1754944e-38, %v2016
      %v2018 = vsel %vm2015, %v2017, %v2013
      %v2019 = vmul.f32 1.0, %v2018
      %v2020 = vrcp.pop %v1960
      %v2021 = vmul.f32 %v1960, %v2020
      %v2022 = vsub.f32 1.0, %v2021
      %v2023 = vmul.f32 %v2020, %v2022
      %v2024 = vadd.f32 %v2020, %v2023
      %vm2025 = vweird.f32 %v1960
      %vm2026 = vweird.f32 %v2020
      %vm2027 = vmor %vm2025, %vm2026
      %v2028 = vsel %vm2027, %v2020, %v2024
      %v2029 = vand.u32 2147483647, %v1960
      %vm2030 = vcmp.eq.f32.partialorder %v2029, 8.507059e+37
      %v2031 = vand.u32 %v1960, 2147483648
      %v2032 = vor.u32 1.1754944e-38, %v2031
      %v2033 = vsel %vm2030, %v2032, %v2028
      %v2034 = vmul.f32 1.0, %v2033
      %v2035 = vrcp.pop %v1961
      %v2036 = vmul.f32 %v1961, %v2035
      %v2037 = vsub.f32 1.0, %v2036
      %v2038 = vmul.f32 %v2035, %v2037
      %v2039 = vadd.f32 %v2035, %v2038
      %vm2040 = vweird.f32 %v1961
      %vm2041 = vweird.f32 %v2035
      %vm2042 = vmor %vm2040, %vm2041
      %v2043 = vsel %vm2042, %v2035, %v2039
      %v2044 = vand.u32 2147483647, %v1961
      %vm2045 = vcmp.eq.f32.partialorder %v2044, 8.507059e+37
      %v2046 = vand.u32 %v1961, 2147483648
      %v2047 = vor.u32 1.1754944e-38, %v2046
      %v2048 = vsel %vm2045, %v2047, %v2043
      %v2049 = vmul.f32 1.0, %v2048
      %v2050 = vrcp.pop %v1962
      %v2051 = vmul.f32 %v1962, %v2050
      %v2052 = vsub.f32 1.0, %v2051
      %v2053 = vmul.f32 %v2050, %v2052
      %v2054 = vadd.f32 %v2050, %v2053
      %vm2055 = vweird.f32 %v1962
      %vm2056 = vweird.f32 %v2050
      %vm2057 = vmor %vm2055, %vm2056
      %v2058 = vsel %vm2057, %v2050, %v2054
      %v2059 = vand.u32 2147483647, %v1962
      %vm2060 = vcmp.eq.f32.partialorder %v2059, 8.507059e+37
      %v2061 = vand.u32 %v1962, 2147483648
      %v2062 = vor.u32 1.1754944e-38, %v2061
      %v2063 = vsel %vm2060, %v2062, %v2058
      %v2064 = vmul.f32 1.0, %v2063
      %v2065 = vrcp.pop %v1963
      %v2066 = vmul.f32 %v1963, %v2065
      %v2067 = vsub.f32 1.0, %v2066
      %v2068 = vmul.f32 %v2065, %v2067
      %v2069 = vadd.f32 %v2065, %v2068
      %vm2070 = vweird.f32 %v1963
      %vm2071 = vweird.f32 %v2065
      %vm2072 = vmor %vm2070, %vm2071
      %v2073 = vsel %vm2072, %v2065, %v2069
      %v2074 = vand.u32 2147483647, %v1963
      %vm2075 = vcmp.eq.f32.partialorder %v2074, 8.507059e+37
      %v2076 = vand.u32 %v1963, 2147483648
      %v2077 = vor.u32 1.1754944e-38, %v2076
      %v2078 = vsel %vm2075, %v2077, %v2073
      %v2079 = vmul.f32 1.0, %v2078
      %v2080 = vrcp.pop %v1964
      %v2081 = vmul.f32 %v1964, %v2080
      %v2082 = vsub.f32 1.0, %v2081
      %v2083 = vmul.f32 %v2080, %v2082
      %v2084 = vadd.f32 %v2080, %v2083
      %vm2085 = vweird.f32 %v1964
      %vm2086 = vweird.f32 %v2080
      %vm2087 = vmor %vm2085, %vm2086
      %v2088 = vsel %vm2087, %v2080, %v2084
      %v2089 = vand.u32 2147483647, %v1964
      %vm2090 = vcmp.eq.f32.partialorder %v2089, 8.507059e+37
      %v2091 = vand.u32 %v1964, 2147483648
      %v2092 = vor.u32 1.1754944e-38, %v2091
      %v2093 = vsel %vm2090, %v2092, %v2088
      %v2094 = vmul.f32 1.0, %v2093
      %v2095 = vrcp.pop %v1965
      %v2096 = vmul.f32 %v1965, %v2095
      %v2097 = vsub.f32 1.0, %v2096
      %v2098 = vmul.f32 %v2095, %v2097
      %v2099 = vadd.f32 %v2095, %v2098
      %vm2100 = vweird.f32 %v1965
      %vm2101 = vweird.f32 %v2095
      %vm2102 = vmor %vm2100, %vm2101
      %v2103 = vsel %vm2102, %v2095, %v2099
      %v2104 = vand.u32 2147483647, %v1965
      %vm2105 = vcmp.eq.f32.partialorder %v2104, 8.507059e+37
      %v2106 = vand.u32 %v1965, 2147483648
      %v2107 = vor.u32 1.1754944e-38, %v2106
      %v2108 = vsel %vm2105, %v2107, %v2103
      %v2109 = vmul.f32 1.0, %v2108
      %v2110 = vrcp.pop %v1966
      %v2111 = vmul.f32 %v1966, %v2110
      %v2112 = vsub.f32 1.0, %v2111
      %v2113 = vmul.f32 %v2110, %v2112
      %v2114 = vadd.f32 %v2110, %v2113
      %vm2115 = vweird.f32 %v1966
      %vm2116 = vweird.f32 %v2110
      %vm2117 = vmor %vm2115, %vm2116
      %v2118 = vsel %vm2117, %v2110, %v2114
      %v2119 = vand.u32 2147483647, %v1966
      %vm2120 = vcmp.eq.f32.partialorder %v2119, 8.507059e+37
      %v2121 = vand.u32 %v1966, 2147483648
      %v2122 = vor.u32 1.1754944e-38, %v2121
      %v2123 = vsel %vm2120, %v2122, %v2118
      %v2124 = vmul.f32 1.0, %v2123
      %v2125 = vrcp.pop %v1967
      %v2126 = vmul.f32 %v1967, %v2125
      %v2127 = vsub.f32 1.0, %v2126
      %v2128 = vmul.f32 %v2125, %v2127
      %v2129 = vadd.f32 %v2125, %v2128
      %vm2130 = vweird.f32 %v1967
      %vm2131 = vweird.f32 %v2125
      %vm2132 = vmor %vm2130, %vm2131
      %v2133 = vsel %vm2132, %v2125, %v2129
      %v2134 = vand.u32 2147483647, %v1967
      %vm2135 = vcmp.eq.f32.partialorder %v2134, 8.507059e+37
      %v2136 = vand.u32 %v1967, 2147483648
      %v2137 = vor.u32 1.1754944e-38, %v2136
      %v2138 = vsel %vm2135, %v2137, %v2133
      %v2139 = vmul.f32 1.0, %v2138
      %v2140 = vrcp.pop %v1968
      %v2141 = vmul.f32 %v1968, %v2140
      %v2142 = vsub.f32 1.0, %v2141
      %v2143 = vmul.f32 %v2140, %v2142
      %v2144 = vadd.f32 %v2140, %v2143
      %vm2145 = vweird.f32 %v1968
      %vm2146 = vweird.f32 %v2140
      %vm2147 = vmor %vm2145, %vm2146
      %v2148 = vsel %vm2147, %v2140, %v2144
      %v2149 = vand.u32 2147483647, %v1968
      %vm2150 = vcmp.eq.f32.partialorder %v2149, 8.507059e+37
      %v2151 = vand.u32 %v1968, 2147483648
      %v2152 = vor.u32 1.1754944e-38, %v2151
      %v2153 = vsel %vm2150, %v2152, %v2148
      %v2154 = vmul.f32 1.0, %v2153
      %v2155 = vrcp.pop %v1969
      %v2156 = vmul.f32 %v1969, %v2155
      %v2157 = vsub.f32 1.0, %v2156
      %v2158 = vmul.f32 %v2155, %v2157
      %v2159 = vadd.f32 %v2155, %v2158
      %vm2160 = vweird.f32 %v1969
      %vm2161 = vweird.f32 %v2155
      %vm2162 = vmor %vm2160, %vm2161
      %v2163 = vsel %vm2162, %v2155, %v2159
      %v2164 = vand.u32 2147483647, %v1969
      %vm2165 = vcmp.eq.f32.partialorder %v2164, 8.507059e+37
      %v2166 = vand.u32 %v1969, 2147483648
      %v2167 = vor.u32 1.1754944e-38, %v2166
      %v2168 = vsel %vm2165, %v2167, %v2163
      %v2169 = vmul.f32 1.0, %v2168
      %v2170 = vrcp.pop %v1970
      %v2171 = vmul.f32 %v1970, %v2170
      %v2172 = vsub.f32 1.0, %v2171
      %v2173 = vmul.f32 %v2170, %v2172
      %v2174 = vadd.f32 %v2170, %v2173
      %vm2175 = vweird.f32 %v1970
      %vm2176 = vweird.f32 %v2170
      %vm2177 = vmor %vm2175, %vm2176
      %v2178 = vsel %vm2177, %v2170, %v2174
      %v2179 = vand.u32 2147483647, %v1970
      %vm2180 = vcmp.eq.f32.partialorder %v2179, 8.507059e+37
      %v2181 = vand.u32 %v1970, 2147483648
      %v2182 = vor.u32 1.1754944e-38, %v2181
      %v2183 = vsel %vm2180, %v2182, %v2178
      %v2184 = vmul.f32 1.0, %v2183
      %v2185 = vrcp.pop %v1971
      %v2186 = vmul.f32 %v1971, %v2185
      %v2187 = vsub.f32 1.0, %v2186
      %v2188 = vmul.f32 %v2185, %v2187
      %v2189 = vadd.f32 %v2185, %v2188
      %vm2190 = vweird.f32 %v1971
      %vm2191 = vweird.f32 %v2185
      %vm2192 = vmor %vm2190, %vm2191
      %v2193 = vsel %vm2192, %v2185, %v2189
      %v2194 = vand.u32 2147483647, %v1971
      %vm2195 = vcmp.eq.f32.partialorder %v2194, 8.507059e+37
      %v2196 = vand.u32 %v1971, 2147483648
      %v2197 = vor.u32 1.1754944e-38, %v2196
      %v2198 = vsel %vm2195, %v2197, %v2193
      %v2199 = vmul.f32 1.0, %v2198
      %v2200 = vrcp.pop %v1972
      %v2201 = vmul.f32 %v1972, %v2200
      %v2202 = vsub.f32 1.0, %v2201
      %v2203 = vmul.f32 %v2200, %v2202
      %v2204 = vadd.f32 %v2200, %v2203
      %vm2205 = vweird.f32 %v1972
      %vm2206 = vweird.f32 %v2200
      %vm2207 = vmor %vm2205, %vm2206
      %v2208 = vsel %vm2207, %v2200, %v2204
      %v2209 = vand.u32 2147483647, %v1972
      %vm2210 = vcmp.eq.f32.partialorder %v2209, 8.507059e+37
      %v2211 = vand.u32 %v1972, 2147483648
      %v2212 = vor.u32 1.1754944e-38, %v2211
      %v2213 = vsel %vm2210, %v2212, %v2208
      %v2214 = vmul.f32 1.0, %v2213
      %v2215 = vrcp.pop %v1973
      %v2216 = vmul.f32 %v1973, %v2215
      %v2217 = vsub.f32 1.0, %v2216
      %v2218 = vmul.f32 %v2215, %v2217
      %v2219 = vadd.f32 %v2215, %v2218
      %vm2220 = vweird.f32 %v1973
      %vm2221 = vweird.f32 %v2215
      %vm2222 = vmor %vm2220, %vm2221
      %v2223 = vsel %vm2222, %v2215, %v2219
      %v2224 = vand.u32 2147483647, %v1973
      %vm2225 = vcmp.eq.f32.partialorder %v2224, 8.507059e+37
      %v2226 = vand.u32 %v1973, 2147483648
      %v2227 = vor.u32 1.1754944e-38, %v2226
      %v2228 = vsel %vm2225, %v2227, %v2223
      %v2229 = vmul.f32 1.0, %v2228
      %v2230 = vrcp.pop %v1974
      %v2231 = vmul.f32 %v1974, %v2230
      %v2232 = vsub.f32 1.0, %v2231
      %v2233 = vmul.f32 %v2230, %v2232
      %v2234 = vadd.f32 %v2230, %v2233
      %vm2235 = vweird.f32 %v1974
      %vm2236 = vweird.f32 %v2230
      %vm2237 = vmor %vm2235, %vm2236
      %v2238 = vsel %vm2237, %v2230, %v2234
      %v2239 = vand.u32 2147483647, %v1974
      %vm2240 = vcmp.eq.f32.partialorder %v2239, 8.507059e+37
      %v2241 = vand.u32 %v1974, 2147483648
      %v2242 = vor.u32 1.1754944e-38, %v2241
      %v2243 = vsel %vm2240, %v2242, %v2238
      %v2244 = vmul.f32 1.0, %v2243
      %v2245 = vrcp.pop %v1975
      %v2246 = vmul.f32 %v1975, %v2245
      %v2247 = vsub.f32 1.0, %v2246
      %v2248 = vmul.f32 %v2245, %v2247
      %v2249 = vadd.f32 %v2245, %v2248
      %vm2250 = vweird.f32 %v1975
      %vm2251 = vweird.f32 %v2245
      %vm2252 = vmor %vm2250, %vm2251
      %v2253 = vsel %vm2252, %v2245, %v2249
      %v2254 = vand.u32 2147483647, %v1975
      %vm2255 = vcmp.eq.f32.partialorder %v2254, 8.507059e+37
      %v2256 = vand.u32 %v1975, 2147483648
      %v2257 = vor.u32 1.1754944e-38, %v2256
      %v2258 = vsel %vm2255, %v2257, %v2253
      %v2259 = vmul.f32 1.0, %v2258
      %v2260 = vrcp.pop %v1976
      %v2261 = vmul.f32 %v1976, %v2260
      %v2262 = vsub.f32 1.0, %v2261
      %v2263 = vmul.f32 %v2260, %v2262
      %v2264 = vadd.f32 %v2260, %v2263
      %vm2265 = vweird.f32 %v1976
      %vm2266 = vweird.f32 %v2260
      %vm2267 = vmor %vm2265, %vm2266
      %v2268 = vsel %vm2267, %v2260, %v2264
      %v2269 = vand.u32 2147483647, %v1976
      %vm2270 = vcmp.eq.f32.partialorder %v2269, 8.507059e+37
      %v2271 = vand.u32 %v1976, 2147483648
      %v2272 = vor.u32 1.1754944e-38, %v2271
      %v2273 = vsel %vm2270, %v2272, %v2268
      %v2274 = vmul.f32 1.0, %v2273
      %v2275 = vrcp.pop %v1977
      %v2276 = vmul.f32 %v1977, %v2275
      %v2277 = vsub.f32 1.0, %v2276
      %v2278 = vmul.f32 %v2275, %v2277
      %v2279 = vadd.f32 %v2275, %v2278
      %vm2280 = vweird.f32 %v1977
      %vm2281 = vweird.f32 %v2275
      %vm2282 = vmor %vm2280, %vm2281
      %v2283 = vsel %vm2282, %v2275, %v2279
      %v2284 = vand.u32 2147483647, %v1977
      %vm2285 = vcmp.eq.f32.partialorder %v2284, 8.507059e+37
      %v2286 = vand.u32 %v1977, 2147483648
      %v2287 = vor.u32 1.1754944e-38, %v2286
      %v2288 = vsel %vm2285, %v2287, %v2283
      %v2289 = vmul.f32 1.0, %v2288
      %v2290 = vrcp.pop %v1978
      %v2291 = vmul.f32 %v1978, %v2290
      %v2292 = vsub.f32 1.0, %v2291
      %v2293 = vmul.f32 %v2290, %v2292
      %v2294 = vadd.f32 %v2290, %v2293
      %vm2295 = vweird.f32 %v1978
      %vm2296 = vweird.f32 %v2290
      %vm2297 = vmor %vm2295, %vm2296
      %v2298 = vsel %vm2297, %v2290, %v2294
      %v2299 = vand.u32 2147483647, %v1978
      %vm2300 = vcmp.eq.f32.partialorder %v2299, 8.507059e+37
      %v2301 = vand.u32 %v1978, 2147483648
      %v2302 = vor.u32 1.1754944e-38, %v2301
      %v2303 = vsel %vm2300, %v2302, %v2298
      %v2304 = vmul.f32 1.0, %v2303
      %v2305 = vrcp.pop %v1979
      %v2306 = vmul.f32 %v1979, %v2305
      %v2307 = vsub.f32 1.0, %v2306
      %v2308 = vmul.f32 %v2305, %v2307
      %v2309 = vadd.f32 %v2305, %v2308
      %vm2310 = vweird.f32 %v1979
      %vm2311 = vweird.f32 %v2305
      %vm2312 = vmor %vm2310, %vm2311
      %v2313 = vsel %vm2312, %v2305, %v2309
      %v2314 = vand.u32 2147483647, %v1979
      %vm2315 = vcmp.eq.f32.partialorder %v2314, 8.507059e+37
      %v2316 = vand.u32 %v1979, 2147483648
      %v2317 = vor.u32 1.1754944e-38, %v2316
      %v2318 = vsel %vm2315, %v2317, %v2313
      %v2319 = vmul.f32 1.0, %v2318
      %v2320 = vrcp.pop %v1980
      %v2321 = vmul.f32 %v1980, %v2320
      %v2322 = vsub.f32 1.0, %v2321
      %v2323 = vmul.f32 %v2320, %v2322
      %v2324 = vadd.f32 %v2320, %v2323
      %vm2325 = vweird.f32 %v1980
      %vm2326 = vweird.f32 %v2320
      %vm2327 = vmor %vm2325, %vm2326
      %v2328 = vsel %vm2327, %v2320, %v2324
      %v2329 = vand.u32 2147483647, %v1980
      %vm2330 = vcmp.eq.f32.partialorder %v2329, 8.507059e+37
      %v2331 = vand.u32 %v1980, 2147483648
      %v2332 = vor.u32 1.1754944e-38, %v2331
      %v2333 = vsel %vm2330, %v2332, %v2328
      %v2334 = vmul.f32 1.0, %v2333
      %v2335 = vrcp.pop %v1981
      %v2336 = vmul.f32 %v1981, %v2335
      %v2337 = vsub.f32 1.0, %v2336
      %v2338 = vmul.f32 %v2335, %v2337
      %v2339 = vadd.f32 %v2335, %v2338
      %vm2340 = vweird.f32 %v1981
      %vm2341 = vweird.f32 %v2335
      %vm2342 = vmor %vm2340, %vm2341
      %v2343 = vsel %vm2342, %v2335, %v2339
      %v2344 = vand.u32 2147483647, %v1981
      %vm2345 = vcmp.eq.f32.partialorder %v2344, 8.507059e+37
      %v2346 = vand.u32 %v1981, 2147483648
      %v2347 = vor.u32 1.1754944e-38, %v2346
      %v2348 = vsel %vm2345, %v2347, %v2343
      %v2349 = vmul.f32 1.0, %v2348
      %v2350 = vrcp.pop %v1982
      %v2351 = vmul.f32 %v1982, %v2350
      %v2352 = vsub.f32 1.0, %v2351
      %v2353 = vmul.f32 %v2350, %v2352
      %v2354 = vadd.f32 %v2350, %v2353
      %vm2355 = vweird.f32 %v1982
      %vm2356 = vweird.f32 %v2350
      %vm2357 = vmor %vm2355, %vm2356
      %v2358 = vsel %vm2357, %v2350, %v2354
      %v2359 = vand.u32 2147483647, %v1982
      %vm2360 = vcmp.eq.f32.partialorder %v2359, 8.507059e+37
      %v2361 = vand.u32 %v1982, 2147483648
      %v2362 = vor.u32 1.1754944e-38, %v2361
      %v2363 = vsel %vm2360, %v2362, %v2358
      %v2364 = vmul.f32 1.0, %v2363
      %v2365 = vrcp.pop %v1983
      %v2366 = vmul.f32 %v1983, %v2365
      %v2367 = vsub.f32 1.0, %v2366
      %v2368 = vmul.f32 %v2365, %v2367
      %v2369 = vadd.f32 %v2365, %v2368
      %vm2370 = vweird.f32 %v1983
      %vm2371 = vweird.f32 %v2365
      %vm2372 = vmor %vm2370, %vm2371
      %v2373 = vsel %vm2372, %v2365, %v2369
      %v2374 = vand.u32 2147483647, %v1983
      %vm2375 = vcmp.eq.f32.partialorder %v2374, 8.507059e+37
      %v2376 = vand.u32 %v1983, 2147483648
      %v2377 = vor.u32 1.1754944e-38, %v2376
      %v2378 = vsel %vm2375, %v2377, %v2373
      %v2379 = vmul.f32 1.0, %v2378
      %v2380 = vrcp.pop %v1984
      %v2381 = vmul.f32 %v1984, %v2380
      %v2382 = vsub.f32 1.0, %v2381
      %v2383 = vmul.f32 %v2380, %v2382
      %v2384 = vadd.f32 %v2380, %v2383
      %vm2385 = vweird.f32 %v1984
      %vm2386 = vweird.f32 %v2380
      %vm2387 = vmor %vm2385, %vm2386
      %v2388 = vsel %vm2387, %v2380, %v2384
      %v2389 = vand.u32 2147483647, %v1984
      %vm2390 = vcmp.eq.f32.partialorder %v2389, 8.507059e+37
      %v2391 = vand.u32 %v1984, 2147483648
      %v2392 = vor.u32 1.1754944e-38, %v2391
      %v2393 = vsel %vm2390, %v2392, %v2388
      %v2394 = vmul.f32 1.0, %v2393
      %v2395 = vrcp.pop %v1985
      %v2396 = vmul.f32 %v1985, %v2395
      %v2397 = vsub.f32 1.0, %v2396
      %v2398 = vmul.f32 %v2395, %v2397
      %v2399 = vadd.f32 %v2395, %v2398
      %vm2400 = vweird.f32 %v1985
      %vm2401 = vweird.f32 %v2395
      %vm2402 = vmor %vm2400, %vm2401
      %v2403 = vsel %vm2402, %v2395, %v2399
      %v2404 = vand.u32 2147483647, %v1985
      %vm2405 = vcmp.eq.f32.partialorder %v2404, 8.507059e+37
      %v2406 = vand.u32 %v1985, 2147483648
      %v2407 = vor.u32 1.1754944e-38, %v2406
      %v2408 = vsel %vm2405, %v2407, %v2403
      %v2409 = vmul.f32 1.0, %v2408
      %v2410 = vrcp.pop %v1986
      %v2411 = vmul.f32 %v1986, %v2410
      %v2412 = vsub.f32 1.0, %v2411
      %v2413 = vmul.f32 %v2410, %v2412
      %v2414 = vadd.f32 %v2410, %v2413
      %vm2415 = vweird.f32 %v1986
      %vm2416 = vweird.f32 %v2410
      %vm2417 = vmor %vm2415, %vm2416
      %v2418 = vsel %vm2417, %v2410, %v2414
      %v2419 = vand.u32 2147483647, %v1986
      %vm2420 = vcmp.eq.f32.partialorder %v2419, 8.507059e+37
      %v2421 = vand.u32 %v1986, 2147483648
      %v2422 = vor.u32 1.1754944e-38, %v2421
      %v2423 = vsel %vm2420, %v2422, %v2418
      %v2424 = vmul.f32 1.0, %v2423
      %v2425 = vrcp.pop %v1987
      %v2426 = vmul.f32 %v1987, %v2425
      %v2427 = vsub.f32 1.0, %v2426
      %v2428 = vmul.f32 %v2425, %v2427
      %v2429 = vadd.f32 %v2425, %v2428
      %vm2430 = vweird.f32 %v1987
      %vm2431 = vweird.f32 %v2425
      %vm2432 = vmor %vm2430, %vm2431
      %v2433 = vsel %vm2432, %v2425, %v2429
      %v2434 = vand.u32 2147483647, %v1987
      %vm2435 = vcmp.eq.f32.partialorder %v2434, 8.507059e+37
      %v2436 = vand.u32 %v1987, 2147483648
      %v2437 = vor.u32 1.1754944e-38, %v2436
      %v2438 = vsel %vm2435, %v2437, %v2433
      %v2439 = vmul.f32 1.0, %v2438
      %v2440 = vrcp.pop %v1988
      %v2441 = vmul.f32 %v1988, %v2440
      %v2442 = vsub.f32 1.0, %v2441
      %v2443 = vmul.f32 %v2440, %v2442
      %v2444 = vadd.f32 %v2440, %v2443
      %vm2445 = vweird.f32 %v1988
      %vm2446 = vweird.f32 %v2440
      %vm2447 = vmor %vm2445, %vm2446
      %v2448 = vsel %vm2447, %v2440, %v2444
      %v2449 = vand.u32 2147483647, %v1988
      %vm2450 = vcmp.eq.f32.partialorder %v2449, 8.507059e+37
      %v2451 = vand.u32 %v1988, 2147483648
      %v2452 = vor.u32 1.1754944e-38, %v2451
      %v2453 = vsel %vm2450, %v2452, %v2448
      %v2454 = vmul.f32 1.0, %v2453
      %v2455 = vrcp.pop %v1989
      %v2456 = vmul.f32 %v1989, %v2455
      %v2457 = vsub.f32 1.0, %v2456
      %v2458 = vmul.f32 %v2455, %v2457
      %v2459 = vadd.f32 %v2455, %v2458
      %vm2460 = vweird.f32 %v1989
      %vm2461 = vweird.f32 %v2455
      %vm2462 = vmor %vm2460, %vm2461
      %v2463 = vsel %vm2462, %v2455, %v2459
      %v2464 = vand.u32 2147483647, %v1989
      %vm2465 = vcmp.eq.f32.partialorder %v2464, 8.507059e+37
      %v2466 = vand.u32 %v1989, 2147483648
      %v2467 = vor.u32 1.1754944e-38, %v2466
      %v2468 = vsel %vm2465, %v2467, %v2463
      %v2469 = vmul.f32 1.0, %v2468
      %2471 = vset.pattern.permute.xlu0 0
      %2472 = vperm.xlu0 %2471, %v2004
      %v2473 = vpop.permute.xlu0 %2472
      %2476 = vset.pattern.permute.xlu0 0
      %2477 = vperm.xlu0 %2476, %v2019
      %v2478 = vpop.permute.xlu0 %2477
      %2481 = vset.pattern.permute.xlu0 0
      %2482 = vperm.xlu0 %2481, %v2034
      %v2483 = vpop.permute.xlu0 %2482
      %2486 = vset.pattern.permute.xlu0 0
      %2487 = vperm.xlu0 %2486, %v2049
      %v2488 = vpop.permute.xlu0 %2487
      %2491 = vset.pattern.permute.xlu0 0
      %2492 = vperm.xlu0 %2491, %v2064
      %v2493 = vpop.permute.xlu0 %2492
      %2496 = vset.pattern.permute.xlu0 0
      %2497 = vperm.xlu0 %2496, %v2079
      %v2498 = vpop.permute.xlu0 %2497
      %2501 = vset.pattern.permute.xlu0 0
      %2502 = vperm.xlu0 %2501, %v2094
      %v2503 = vpop.permute.xlu0 %2502
      %2506 = vset.pattern.permute.xlu0 0
      %2507 = vperm.xlu0 %2506, %v2109
      %v2508 = vpop.permute.xlu0 %2507
      %2511 = vset.pattern.permute.xlu0 0
      %2512 = vperm.xlu0 %2511, %v2124
      %v2513 = vpop.permute.xlu0 %2512
      %2516 = vset.pattern.permute.xlu0 0
      %2517 = vperm.xlu0 %2516, %v2139
      %v2518 = vpop.permute.xlu0 %2517
      %2521 = vset.pattern.permute.xlu0 0
      %2522 = vperm.xlu0 %2521, %v2154
      %v2523 = vpop.permute.xlu0 %2522
      %2526 = vset.pattern.permute.xlu0 0
      %2527 = vperm.xlu0 %2526, %v2169
      %v2528 = vpop.permute.xlu0 %2527
      %2531 = vset.pattern.permute.xlu0 0
      %2532 = vperm.xlu0 %2531, %v2184
      %v2533 = vpop.permute.xlu0 %2532
      %2536 = vset.pattern.permute.xlu0 0
      %2537 = vperm.xlu0 %2536, %v2199
      %v2538 = vpop.permute.xlu0 %2537
      %2541 = vset.pattern.permute.xlu0 0
      %2542 = vperm.xlu0 %2541, %v2214
      %v2543 = vpop.permute.xlu0 %2542
      %2546 = vset.pattern.permute.xlu0 0
      %2547 = vperm.xlu0 %2546, %v2229
      %v2548 = vpop.permute.xlu0 %2547
      %2551 = vset.pattern.permute.xlu0 0
      %2552 = vperm.xlu0 %2551, %v2244
      %v2553 = vpop.permute.xlu0 %2552
      %2556 = vset.pattern.permute.xlu0 0
      %2557 = vperm.xlu0 %2556, %v2259
      %v2558 = vpop.permute.xlu0 %2557
      %2561 = vset.pattern.permute.xlu0 0
      %2562 = vperm.xlu0 %2561, %v2274
      %v2563 = vpop.permute.xlu0 %2562
      %2566 = vset.pattern.permute.xlu0 0
      %2567 = vperm.xlu0 %2566, %v2289
      %v2568 = vpop.permute.xlu0 %2567
      %2571 = vset.pattern.permute.xlu0 0
      %2572 = vperm.xlu0 %2571, %v2304
      %v2573 = vpop.permute.xlu0 %2572
      %2576 = vset.pattern.permute.xlu0 0
      %2577 = vperm.xlu0 %2576, %v2319
      %v2578 = vpop.permute.xlu0 %2577
      %2581 = vset.pattern.permute.xlu0 0
      %2582 = vperm.xlu0 %2581, %v2334
      %v2583 = vpop.permute.xlu0 %2582
      %2586 = vset.pattern.permute.xlu0 0
      %2587 = vperm.xlu0 %2586, %v2349
      %v2588 = vpop.permute.xlu0 %2587
      %2591 = vset.pattern.permute.xlu0 0
      %2592 = vperm.xlu0 %2591, %v2364
      %v2593 = vpop.permute.xlu0 %2592
      %2596 = vset.pattern.permute.xlu0 0
      %2597 = vperm.xlu0 %2596, %v2379
      %v2598 = vpop.permute.xlu0 %2597
      %2601 = vset.pattern.permute.xlu0 0
      %2602 = vperm.xlu0 %2601, %v2394
      %v2603 = vpop.permute.xlu0 %2602
      %2606 = vset.pattern.permute.xlu0 0
      %2607 = vperm.xlu0 %2606, %v2409
      %v2608 = vpop.permute.xlu0 %2607
      %2611 = vset.pattern.permute.xlu0 0
      %2612 = vperm.xlu0 %2611, %v2424
      %v2613 = vpop.permute.xlu0 %2612
      %2616 = vset.pattern.permute.xlu0 0
      %2617 = vperm.xlu0 %2616, %v2439
      %v2618 = vpop.permute.xlu0 %2617
      %2621 = vset.pattern.permute.xlu0 0
      %2622 = vperm.xlu0 %2621, %v2454
      %v2623 = vpop.permute.xlu0 %2622
      %2626 = vset.pattern.permute.xlu0 0
      %2627 = vperm.xlu0 %2626, %v2469
      %v2628 = vpop.permute.xlu0 %2627
      %v2630 = vmul.f32 %v2473, %v1031
      %v2631 = vmul.f32 %v2478, %v1034
      %v2632 = vmul.f32 %v2483, %v1037
      %v2633 = vmul.f32 %v2488, %v1040
      %v2634 = vmul.f32 %v2493, %v1043
      %v2635 = vmul.f32 %v2498, %v1046
      %v2636 = vmul.f32 %v2503, %v1049
      %v2637 = vmul.f32 %v2508, %v1052
      %v2638 = vmul.f32 %v2513, %v1055
      %v2639 = vmul.f32 %v2518, %v1058
      %v2640 = vmul.f32 %v2523, %v1061
      %v2641 = vmul.f32 %v2528, %v1064
      %v2642 = vmul.f32 %v2533, %v1067
      %v2643 = vmul.f32 %v2538, %v1070
      %v2644 = vmul.f32 %v2543, %v1073
      %v2645 = vmul.f32 %v2548, %v1076
      %v2646 = vmul.f32 %v2553, %v1079
      %v2647 = vmul.f32 %v2558, %v1082
      %v2648 = vmul.f32 %v2563, %v1085
      %v2649 = vmul.f32 %v2568, %v1088
      %v2650 = vmul.f32 %v2573, %v1091
      %v2651 = vmul.f32 %v2578, %v1094
      %v2652 = vmul.f32 %v2583, %v1097
      %v2653 = vmul.f32 %v2588, %v1100
      %v2654 = vmul.f32 %v2593, %v1103
      %v2655 = vmul.f32 %v2598, %v1106
      %v2656 = vmul.f32 %v2603, %v1109
      %v2657 = vmul.f32 %v2608, %v1112
      %v2658 = vmul.f32 %v2613, %v1115
      %v2659 = vmul.f32 %v2618, %v1118
      %v2660 = vmul.f32 %v2623, %v1121
      %v2661 = vmul.f32 %v2628, %v1124
      %v2662 = vld [vmem:[#allocation2] sm:$0xff]
      %v2663 = vld [vmem:[#allocation2 + $0x8] sm:$0xff]
      %v2664 = vld [vmem:[#allocation2 + $0x10] sm:$0xff]
      %v2665 = vld [vmem:[#allocation2 + $0x18] sm:$0xff]
      %2666 = vxpose.xlu0.b32.start [1/16] %v884, 128
      %2667 = vxpose.xlu0.b32.cont [2/16] %v885, 128
      %2668 = vxpose.xlu0.b32.cont [3/16] %v886, 128
      %2669 = vxpose.xlu0.b32.cont [4/16] %v887, 128
      %2670 = vxpose.xlu0.b32.cont [5/16] %v888, 128
      %2671 = vxpose.xlu0.b32.cont [6/16] %v889, 128
      %2672 = vxpose.xlu0.b32.cont [7/16] %v890, 128
      %2673 = vxpose.xlu0.b32.cont [8/16] %v891, 128
      %2674 = vxpose.xlu0.b32.cont [9/16] %v892, 128
      %2675 = vxpose.xlu0.b32.cont [10/16] %v893, 128
      %2676 = vxpose.xlu0.b32.cont [11/16] %v894, 128
      %2677 = vxpose.xlu0.b32.cont [12/16] %v895, 128
      %2678 = vxpose.xlu0.b32.cont [13/16] %v896, 128
      %2679 = vxpose.xlu0.b32.cont [14/16] %v897, 128
      %2680 = vxpose.xlu0.b32.cont [15/16] %v898, 128
      %2681 = vxpose.xlu0.b32.end [16/16] %v899, 128
      %v2682 = vpop.trf.xlu0
      %v2683 = vpop.trf.xlu0
      %v2684 = vpop.trf.xlu0
      %v2685 = vpop.trf.xlu0
      %v2686 = vpop.trf.xlu0
      %v2687 = vpop.trf.xlu0
      %v2688 = vpop.trf.xlu0
      %v2689 = vpop.trf.xlu0
      %v2690 = vpop.trf.xlu0
      %v2691 = vpop.trf.xlu0
      %v2692 = vpop.trf.xlu0
      %v2693 = vpop.trf.xlu0
      %v2694 = vpop.trf.xlu0
      %v2695 = vpop.trf.xlu0
      %v2696 = vpop.trf.xlu0
      %v2697 = vpop.trf.xlu0
      %2698 = vxpose.xlu0.b32.start [1/16] %v900, 128
      %2699 = vxpose.xlu0.b32.cont [2/16] %v901, 128
      %2700 = vxpose.xlu0.b32.cont [3/16] %v902, 128
      %2701 = vxpose.xlu0.b32.cont [4/16] %v903, 128
      %2702 = vxpose.xlu0.b32.cont [5/16] %v904, 128
      %2703 = vxpose.xlu0.b32.cont [6/16] %v905, 128
      %2704 = vxpose.xlu0.b32.cont [7/16] %v906, 128
      %2705 = vxpose.xlu0.b32.cont [8/16] %v907, 128
      %2706 = vxpose.xlu0.b32.cont [9/16] %v908, 128
      %2707 = vxpose.xlu0.b32.cont [10/16] %v909, 128
      %2708 = vxpose.xlu0.b32.cont [11/16] %v910, 128
      %2709 = vxpose.xlu0.b32.cont [12/16] %v911, 128
      %2710 = vxpose.xlu0.b32.cont [13/16] %v912, 128
      %2711 = vxpose.xlu0.b32.cont [14/16] %v913, 128
      %2712 = vxpose.xlu0.b32.cont [15/16] %v914, 128
      %2713 = vxpose.xlu0.b32.end [16/16] %v915, 128
      %v2714 = vpop.trf.xlu0
      %v2715 = vpop.trf.xlu0
      %v2716 = vpop.trf.xlu0
      %v2717 = vpop.trf.xlu0
      %v2718 = vpop.trf.xlu0
      %v2719 = vpop.trf.xlu0
      %v2720 = vpop.trf.xlu0
      %v2721 = vpop.trf.xlu0
      %v2722 = vpop.trf.xlu0
      %v2723 = vpop.trf.xlu0
      %v2724 = vpop.trf.xlu0
      %v2725 = vpop.trf.xlu0
      %v2726 = vpop.trf.xlu0
      %v2727 = vpop.trf.xlu0
      %v2728 = vpop.trf.xlu0
      %v2729 = vpop.trf.xlu0
      %2730 = vmatpush.msra.mxu0 %v2645
      %2731 = vmatpush.msra.mxu0 %v2644
      %2732 = vmatpush.msra.mxu0 %v2643
      %2733 = vmatpush.msra.mxu0 %v2642
      %2734 = vmatpush.msra.mxu0 %v2641
      %2735 = vmatpush.msra.mxu0 %v2640
      %2736 = vmatpush.msra.mxu0 %v2639
      %2737 = vmatpush.msra.mxu0 %v2638
      %2738 = vmatpush.msra.mxu0 %v2637
      %2739 = vmatpush.msra.mxu0 %v2636
      %2740 = vmatpush.msra.mxu0 %v2635
      %2741 = vmatpush.msra.mxu0 %v2634
      %2742 = vmatpush.msra.mxu0 %v2633
      %2743 = vmatpush.msra.mxu0 %v2632
      %2744 = vmatpush.msra.mxu0 %v2631
      %2745 = vmatpush.msra.mxu0 %v2630
      %2746 = vmatmul.f32.gmra.mxu0 %v2682
      %v2747 = vpop.f32.mrf.mxu0
      %v2748 = vadd.f32 0.0, %v2747
      %2749 = vmatmul.f32.gmra.mxu0 %v2683
      %v2750 = vpop.f32.mrf.mxu0
      %v2751 = vadd.f32 0.0, %v2750
      %2752 = vmatmul.f32.gmra.mxu0 %v2684
      %v2753 = vpop.f32.mrf.mxu0
      %v2754 = vadd.f32 0.0, %v2753
      %2755 = vmatmul.f32.gmra.mxu0 %v2685
      %v2756 = vpop.f32.mrf.mxu0
      %v2757 = vadd.f32 0.0, %v2756
      %2758 = vdwg.mxu0
      %2759 = vmatpush.msra.mxu0 %v2661
      %2760 = vmatpush.msra.mxu0 %v2660
      %2761 = vmatpush.msra.mxu0 %v2659
      %2762 = vmatpush.msra.mxu0 %v2658
      %2763 = vmatpush.msra.mxu0 %v2657
      %2764 = vmatpush.msra.mxu0 %v2656
      %2765 = vmatpush.msra.mxu0 %v2655
      %2766 = vmatpush.msra.mxu0 %v2654
      %2767 = vmatpush.msra.mxu0 %v2653
      %2768 = vmatpush.msra.mxu0 %v2652
      %2769 = vmatpush.msra.mxu0 %v2651
      %2770 = vmatpush.msra.mxu0 %v2650
      %2771 = vmatpush.msra.mxu0 %v2649
      %2772 = vmatpush.msra.mxu0 %v2648
      %2773 = vmatpush.msra.mxu0 %v2647
      %2774 = vmatpush.msra.mxu0 %v2646
      %2775 = vmatmul.f32.gmra.mxu0 %v2714
      %v2776 = vpop.f32.mrf.mxu0
      %v2777 = vadd.f32 %v2748, %v2776
      %2778 = vmatmul.f32.gmra.mxu0 %v2715
      %v2779 = vpop.f32.mrf.mxu0
      %v2780 = vadd.f32 %v2751, %v2779
      %2781 = vmatmul.f32.gmra.mxu0 %v2716
      %v2782 = vpop.f32.mrf.mxu0
      %v2783 = vadd.f32 %v2754, %v2782
      %2784 = vmatmul.f32.gmra.mxu0 %v2717
      %v2785 = vpop.f32.mrf.mxu0
      %v2786 = vadd.f32 %v2757, %v2785
      %2787 = vdwg.mxu0
      %v2788 = vadd.f32 %v2662, %v2777
      %v2789 = vadd.f32 %v2663, %v2780
      %v2790 = vadd.f32 %v2664, %v2783
      %v2791 = vadd.f32 %v2665, %v2786
      %2792 = vst.msk [vmem:[#allocation2] sm:$0xff] %vm1377, %v2788
      %2793 = vst.msk [vmem:[#allocation2 + $0x8] sm:$0xff] %vm1377, %v2789
      %2794 = vst.msk [vmem:[#allocation2 + $0x10] sm:$0xff] %vm1377, %v2790
      %2795 = vst.msk [vmem:[#allocation2 + $0x18] sm:$0xff] %vm1377, %v2791
      %p2796 = scmp.eq.s32.totalorder %s26, 1
      // Predicated region
      $region77: #{message_net.1} parent=71 // pred_check
        %p2797 = pneg %p2796
      $region78: #{message_net.1} parent=71 // pred_check_branch
        %2799 = sbr.rel (%p2797) target = $region80
      $region79: #{message_net.1} parent=71 // pred_region
        %v2800 = vld [vmem:[#allocation2] sm:$0xff]
        %v2801 = vld [vmem:[#allocation2 + $0x8] sm:$0xff]
        %v2802 = vld [vmem:[#allocation2 + $0x10] sm:$0xff]
        %v2803 = vld [vmem:[#allocation2 + $0x18] sm:$0xff]
        %v2804 = vpack.c.bf16 %v2801, %v2800
        %v2805 = vpack.c.bf16 %v2803, %v2802
        %v2806 = vld [vmem:[%s8] sm:$0xf]
        %v2807 = vld [vmem:[%s8 + $0x4] sm:$0xf]
        %v2808 = vpack.c.bf16 %v463, %v462
        %v2809 = vpack.c.bf16 %v465, %v464
        %v2810 = vld [vmem:[%s9] sm:$0xf]
        %v2811 = vld [vmem:[%s9 + $0x4] sm:$0xf]
        %v2814 = vunpack.c.l.b16 %v2810
        %v2815 = vunpack.c.l.b16 %v2811
        %v2816 = vpack.c.b16 %v2815, %v2814
        %v2819 = vsel %vm1377, %v2808, 0
        %v2822 = vsel %vm1377, %v2809, 0
        %2824 = vmatpush.bf16.msra.mxu0 0
        %2825 = vmatpush.bf16.msra.mxu0 0
        %2826 = vmatpush.bf16.msra.mxu0 0
        %2827 = vmatpush.bf16.msra.mxu0 0
        %2828 = vmatpush.bf16.msra.mxu0 0
        %2829 = vmatpush.bf16.msra.mxu0 0
        %2830 = vmatpush.bf16.msra.mxu0 0
        %2831 = vmatpush.bf16.msra.mxu0 %v2816
        %2832 = vmatmul.bf16.gmra.mxu0 %v2819
        %v2833 = vpop.f32.mrf.mxu0
        %v2834 = vadd.f32 0.0, %v2833
        %v2835 = vpop.f32.mrf.mxu0
        %v2836 = vadd.f32 0.0, %v2835
        %2837 = vmatmul.bf16.gmra.mxu0 %v2822
        %v2838 = vpop.f32.mrf.mxu0
        %v2839 = vadd.f32 0.0, %v2838
        %v2840 = vpop.f32.mrf.mxu0
        %v2841 = vadd.f32 0.0, %v2840
        %2842 = vdwg.mxu0
        %v2845 = vunpack.c.l.b16 %v2806
        %v2846 = vunpack.c.l.b16 %v2807
        %v2847 = vpack.c.b16 %v2846, %v2845
        %v2850 = vsel %vm1377, %v2804, 0
        %v2853 = vsel %vm1377, %v2805, 0
        %2855 = vmatpush.bf16.msra.mxu0 0
        %2856 = vmatpush.bf16.msra.mxu0 0
        %2857 = vmatpush.bf16.msra.mxu0 0
        %2858 = vmatpush.bf16.msra.mxu0 0
        %2859 = vmatpush.bf16.msra.mxu0 0
        %2860 = vmatpush.bf16.msra.mxu0 0
        %2861 = vmatpush.bf16.msra.mxu0 0
        %2862 = vmatpush.bf16.msra.mxu0 %v2847
        %2863 = vmatmul.bf16.gmra.mxu0 %v2850
        %v2864 = vpop.f32.mrf.mxu0
        %v2865 = vadd.f32 %v2834, %v2864
        %v2866 = vpop.f32.mrf.mxu0
        %v2867 = vadd.f32 %v2836, %v2866
        %2868 = vmatmul.bf16.gmra.mxu0 %v2853
        %v2869 = vpop.f32.mrf.mxu0
        %v2870 = vadd.f32 %v2839, %v2869
        %v2871 = vpop.f32.mrf.mxu0
        %v2872 = vadd.f32 %v2841, %v2871
        %2873 = vdwg.mxu0
        %v2874 = vld [vmem:[%s10] sm:$0x1]
        %v2876 = vperm.slane %v2874, 0
        %v2878 = vadd.f32 %v2865, %v2876
        %v2879 = vadd.f32 %v2867, %v2876
        %v2880 = vadd.f32 %v2870, %v2876
        %v2881 = vadd.f32 %v2872, %v2876
        %v2882 = vmax.f32 %v2878, 0.0
        %v2883 = vmax.f32 %v2879, 0.0
        %v2884 = vmax.f32 %v2880, 0.0
        %v2885 = vmax.f32 %v2881, 0.0
        %v2886 = vpack.c.bf16 %v2883, %v2882
        %v2887 = vpack.c.bf16 %v2885, %v2884
        %v2888 = vld [vmem:[%s11] sm:$0xf]
        %v2889 = vld [vmem:[%s11 + $0x4] sm:$0xf]
        %v2890 = vld [vmem:[%s11 + $0x8] sm:$0xf]
        %v2891 = vld [vmem:[%s11 + $0xc] sm:$0xf]
        %v2892 = vld [vmem:[%s11 + $0x10] sm:$0xf]
        %v2893 = vld [vmem:[%s11 + $0x14] sm:$0xf]
        %v2894 = vld [vmem:[%s11 + $0x18] sm:$0xf]
        %v2895 = vld [vmem:[%s11 + $0x1c] sm:$0xf]
        %v2896 = vld [vmem:[%s11 + $0x20] sm:$0xf]
        %v2897 = vld [vmem:[%s11 + $0x24] sm:$0xf]
        %v2898 = vld [vmem:[%s11 + $0x28] sm:$0xf]
        %v2899 = vld [vmem:[%s11 + $0x2c] sm:$0xf]
        %v2900 = vld [vmem:[%s11 + $0x30] sm:$0xf]
        %v2901 = vld [vmem:[%s11 + $0x34] sm:$0xf]
        %v2902 = vld [vmem:[%s11 + $0x38] sm:$0xf]
        %v2903 = vld [vmem:[%s11 + $0x3c] sm:$0xf]
        %v2904 = vld [vmem:[%s12] sm:$0x1]
        %v2906 = vperm.slane %v2904, 0
        %v2924 = vunpack.c.l.b16 %v2888
        %v2925 = vunpack.c.l.b16 %v2889
        %v2926 = vunpack.c.l.b16 %v2890
        %v2927 = vunpack.c.l.b16 %v2891
        %v2928 = vunpack.c.l.b16 %v2892
        %v2929 = vunpack.c.l.b16 %v2893
        %v2930 = vunpack.c.l.b16 %v2894
        %v2931 = vunpack.c.l.b16 %v2895
        %v2932 = vunpack.c.l.b16 %v2896
        %v2933 = vunpack.c.l.b16 %v2897
        %v2934 = vunpack.c.l.b16 %v2898
        %v2935 = vunpack.c.l.b16 %v2899
        %v2936 = vunpack.c.l.b16 %v2900
        %v2937 = vunpack.c.l.b16 %v2901
        %v2938 = vunpack.c.l.b16 %v2902
        %v2939 = vunpack.c.l.b16 %v2903
        %v2940 = vpack.c.b16 %v2925, %v2924
        %v2941 = vpack.c.b16 %v2927, %v2926
        %v2942 = vpack.c.b16 %v2929, %v2928
        %v2943 = vpack.c.b16 %v2931, %v2930
        %v2944 = vpack.c.b16 %v2933, %v2932
        %v2945 = vpack.c.b16 %v2935, %v2934
        %v2946 = vpack.c.b16 %v2937, %v2936
        %v2947 = vpack.c.b16 %v2939, %v2938
        %2956 = vmatpush.bf16.msra.mxu0 %v2947
        %2957 = vmatpush.bf16.msra.mxu0 %v2946
        %2958 = vmatpush.bf16.msra.mxu0 %v2945
        %2959 = vmatpush.bf16.msra.mxu0 %v2944
        %2960 = vmatpush.bf16.msra.mxu0 %v2943
        %2961 = vmatpush.bf16.msra.mxu0 %v2942
        %2962 = vmatpush.bf16.msra.mxu0 %v2941
        %2963 = vmatpush.bf16.msra.mxu0 %v2940
        %2964 = vmatmul.bf16.gmra.mxu0 %v2886
        %v2965 = vpop.f32.mrf.mxu0
        %v2966 = vadd.f32 %v2906, %v2965
        %v2967 = vpop.f32.mrf.mxu0
        %v2968 = vadd.f32 %v2906, %v2967
        %2969 = vmatmul.bf16.gmra.mxu0 %v2887
        %v2970 = vpop.f32.mrf.mxu0
        %v2971 = vadd.f32 %v2906, %v2970
        %v2972 = vpop.f32.mrf.mxu0
        %v2973 = vadd.f32 %v2906, %v2972
        %2974 = vdwg.mxu0
        %v2975 = vadd.f32 %v2966, %v462
        %v2976 = vadd.f32 %v2968, %v463
        %v2977 = vadd.f32 %v2971, %v464
        %v2978 = vadd.f32 %v2973, %v465
        %2979 = vst.msk [vmem:[%s13] sm:$0xff] %vm1377, %v2975
        %2980 = vst.msk [vmem:[%s13 + $0x8] sm:$0xff] %vm1377, %v2976
        %2981 = vst.msk [vmem:[%s13 + $0x10] sm:$0xff] %vm1377, %v2977
        %2982 = vst.msk [vmem:[%s13 + $0x18] sm:$0xff] %vm1377, %v2978
      $region80: #{message_net.1} parent=71 // pred_fallthru
        _
      // Predicated region
      $region81: #{message_net.1} parent=71 // pred_check
        %p2983 = pneg %p322
      $region82: #{message_net.1} parent=71 // pred_check_branch
        %2985 = sbr.rel (%p2983) target = $region84
      $region83: #{message_net.1} parent=71 // pred_region
        _
      $region84: #{message_net.1} parent=71 // pred_fallthru
        _
      // Predicated region
      $region85: #{message_net.1} parent=71 // pred_check
        %p2986 = pneg %p322
      $region86: #{message_net.1} parent=71 // pred_check_branch
        %2988 = sbr.rel (%p2986) target = $region88
      $region87: #{message_net.1} parent=71 // pred_region
        _
      $region88: #{message_net.1} parent=71 // pred_fallthru
        _
    $region72: #{message_net.1} parent=5 // pred_fallthru
      _
    %p2989 = scmp.le.s32.totalorder 2, %s21
    // Predicated region
    $region89: #{message_net.1} parent=5 // pred_check
      %p2990 = pneg %p2989
    $region90: #{message_net.1} parent=5 // pred_check_branch
      %2992 = sbr.rel (%p2990) target = $region92
    $region91: #{message_net.1} parent=5 // pred_region
      %s2993 = ssub.s32 %s21, 2
    $region92: #{message_net.1} parent=5 // pred_fallthru
      _
  $region6: #{message_net.1} parent=0 // loop_footer
    %s25 = sadd.s32 1, %s21
  $region7: #{message_net.1} parent=0 // loop_footer_branch
    %20 = sbr.rel target = $region3
  $region8: #{message_net.1} parent=0 // loop_exit
    _

</llo_original>
